<compile_context>
chip_gen: v7x
topology: tpu7x:2x2x1
jax: 0.10.0
libtpu: 0.0.40
codegen_flags: <defaults>
</compile_context>

<pallas_src>
import jax
import jax.numpy as jnp
from jax.experimental import pallas as pl
from jax.experimental.pallas import tpu as pltpu


def _round_up(n, m):
    return ((n + m - 1) // m) * m


def _cdiv(a, b):
    return (a + b - 1) // b


def dqn_kernel(x_ref, w1_ref, b1_ref, w2_ref, b2_ref, w3_ref, b3_ref, o_ref):
    # x_ref: [TB, S] f32 (cast to bf16 here); weights bf16 [in, out]; biases f32 [1, out].
    x = x_ref[...].astype(jnp.bfloat16)

    # Layer 1: Linear(S -> 128) + ReLU   (bf16 MXU, f32 accumulate, f32 epilogue)
    h1 = jnp.dot(x, w1_ref[...], preferred_element_type=jnp.float32)
    h1 = jnp.maximum(h1 + b1_ref[...], 0.0).astype(jnp.bfloat16)   # bf16 right away

    # Layer 2: Linear(128 -> 64) + ReLU (no lane padding; h2 never hits HBM)
    h2 = jnp.dot(h1, w2_ref[...], preferred_element_type=jnp.float32)
    h2 = jnp.maximum(h2 + b2_ref[...], 0.0).astype(jnp.bfloat16)

    # Layer 3: Linear(64 -> A), no activation; narrow (TB, A) store.
    out = jnp.dot(h2, w3_ref[...], preferred_element_type=jnp.float32)
    o_ref[...] = (out + b3_ref[...]).astype(o_ref.dtype)


def _choose_batch_tile(batch):
    """Batch tile: multiple of 16 (bf16 sublane packing), <= 2048 rows, and >= 2 grid
    steps for large batches so v7x megacore can split tiles across both TensorCores."""
    b16 = _round_up(batch, 16)
    if b16 <= 1024:
        return b16
    n_tiles = max(2, _cdiv(b16, 2048))
    return _round_up(_cdiv(b16, n_tiles), 16)


def _xla_forward_bf16(x, p):
    """Small-batch (act) path: fused XLA dot chain with the SAME numerics as the kernel
    (bf16 operands, f32 accumulation) so Q-values never mix precisions across paths."""
    bf = jnp.bfloat16
    h1 = jnp.dot(x.astype(bf), p["w1"].astype(bf), preferred_element_type=jnp.float32)
    h1 = jnp.maximum(h1 + p["b1"], 0.0)
    h2 = jnp.dot(h1.astype(bf), p["w2"].astype(bf), preferred_element_type=jnp.float32)
    h2 = jnp.maximum(h2 + p["b2"], 0.0)
    out = jnp.dot(h2.astype(bf), p["w3"].astype(bf), preferred_element_type=jnp.float32)
    return out + p["b3"]


def dqn_forward(x, params, *, min_pallas_batch=256):
    """x: [B, state_size] float32. params: dict of [in, out] weights + [1, out] biases."""
    B, S = x.shape
    A = params["w3"].shape[1]

    # Tiny act-path batches: launch latency of a grid=(1,) pallas_call isn't worth it.
    if B < min_pallas_batch:
        return _xla_forward_bf16(x, params)

    H1 = params["w1"].shape[1]          # 128
    H2 = params["w2"].shape[1]          # 64

    bf16, f32 = jnp.bfloat16, jnp.float32
    w1 = params["w1"].astype(bf16)
    b1 = params["b1"].astype(f32)
    w2 = params["w2"].astype(bf16)
    b2 = params["b2"].astype(f32)
    w3 = params["w3"].astype(bf16)
    b3 = params["b3"].astype(f32)

    TB = _choose_batch_tile(B)
    grid = (_cdiv(B, TB),)              # ragged last tile handled by Pallas block padding

    # Streamed x / out tiles follow the batch grid; weights/biases use constant
    # index maps so they are DMA'd once and stay resident in VMEM.
    resident = lambda arr: pl.BlockSpec(arr.shape, lambda i: (0, 0))
    in_specs = [
        pl.BlockSpec((TB, S), lambda i: (i, 0)),
        resident(w1), resident(b1),
        resident(w2), resident(b2),
        resident(w3), resident(b3),
    ]
    out_specs = pl.BlockSpec((TB, A), lambda i: (i, 0))

    flops = 2 * B * (S * H1 + H1 * H2 + H2 * A)
    bytes_accessed = (
        B * S * 4                                    # x read (f32)
        + (S * H1 + H1 * H2 + H2 * A) * 2            # bf16 weights
        + (H1 + H2 + A) * 4                          # f32 biases
        + B * A * 4                                  # narrow f32 output write
    )

    return pl.pallas_call(
        dqn_kernel,
        out_shape=jax.ShapeDtypeStruct((B, A), f32),
        grid=grid,
        in_specs=in_specs,
        out_specs=out_specs,
        compiler_params=pltpu.CompilerParams(
            dimension_semantics=("parallel",),        # v7x: shard batch tiles across TCs
            vmem_limit_bytes=32 * 1024 * 1024,        # headroom over v5e's 16 MiB default
        ),
        cost_estimate=pl.CostEstimate(
            flops=flops, transcendentals=0, bytes_accessed=bytes_accessed),
    )(x, w1, b1, w2, b2, w3, b3)


def init_params(key, state_size, action_size):
    """Deterministic init mimicking nn.Linear; weights stored as [in, out]."""
    ks = jax.random.split(key, 6)

    def lin(kw, kb, fan_in, fan_out):
        bound = 1.0 / jnp.sqrt(fan_in)
        w = jax.random.uniform(kw, (fan_in, fan_out), jnp.float32, -bound, bound)
        b = jax.random.uniform(kb, (1, fan_out), jnp.float32, -bound, bound)
        return w, b

    w1, b1 = lin(ks[0], ks[1], state_size, 128)
    w2, b2 = lin(ks[2], ks[3], 128, 64)
    w3, b3 = lin(ks[4], ks[5], 64, action_size)
    return {"w1": w1, "b1": b1, "w2": w2, "b2": b2, "w3": w3, "b3": b3}


def reference_forward_f32(x, p):
    h1 = jnp.maximum(x @ p["w1"] + p["b1"], 0.0)
    h2 = jnp.maximum(h1 @ p["w2"] + p["b2"], 0.0)
    return h2 @ p["w3"] + p["b3"]


def reference_forward_bf16(x, p):
    """Matches the kernel's numerics: bf16 MXU inputs, f32 accumulation/epilogue."""
    return _xla_forward_bf16(x, p)


if __name__ == "__main__":
    key = jax.random.PRNGKey(0)
    k_param, k_x_big, k_x_small = jax.random.split(key, 3)

    state_size, action_size = 16, 4
    params = init_params(k_param, state_size, action_size)

    fwd = jax.jit(dqn_forward)

    # Large-batch (replay/training) path -> Pallas kernel.
    B_big = 512
    x_big = jax.random.normal(k_x_big, (B_big, state_size), jnp.float32)
    out_big = jax.block_until_ready(fwd(x_big, params))
    assert out_big.shape == (B_big, action_size)

    # Tight check against a bf16-matmul reference (same numerics as the kernel).
    ref_bf16 = reference_forward_bf16(x_big, params)
    assert jnp.allclose(out_big, ref_bf16, atol=1e-3, rtol=1e-3)
    # Loose check against the pure-f32 reference (bf16 operands ~0.4% rel precision).
    ref_f32 = reference_forward_f32(x_big, params)
    assert jnp.allclose(out_big, ref_f32, atol=5e-2, rtol=5e-2)

    # Small-batch (act) path -> fused XLA dot chain with identical numerics.
    B_small = 8
    x_small = jax.random.normal(k_x_small, (B_small, state_size), jnp.float32)
    out_small = jax.block_until_ready(fwd(x_small, params))
    assert out_small.shape == (B_small, action_size)
    assert jnp.allclose(out_small, reference_forward_bf16(x_small, params),
                        atol=1e-3, rtol=1e-3)

    print("KERNEL_OK")
</pallas_src>

<mosaic_0001>
module attributes {stable_mosaic.version = 11 : i64} {
  func.func @dqn_kernel(%arg0: i32, %arg1: memref<512x16xf32, #tpu.memory_space<vmem>>, %arg2: memref<16x128xbf16, #tpu.memory_space<vmem>>, %arg3: memref<1x128xf32, #tpu.memory_space<vmem>>, %arg4: memref<128x64xbf16, #tpu.memory_space<vmem>>, %arg5: memref<1x64xf32, #tpu.memory_space<vmem>>, %arg6: memref<64x4xbf16, #tpu.memory_space<vmem>>, %arg7: memref<1x4xf32, #tpu.memory_space<vmem>>, %arg8: memref<512x4xf32, #tpu.memory_space<vmem>>) attributes {dimension_semantics = [#tpu.dimension_semantics<parallel>], iteration_bounds = array<i64: 1>, scalar_prefetch = 0 : i64, scratch_operands = 0 : i64, tpu.core_type = #tpu.core_type<tc>, window_params = [{transform_indices = @transform_0, window_bounds = array<i64: 512, 16>}, {pipeline_mode = #tpu.pipeline_mode<synchronous>, transform_indices = @transform_1, window_bounds = array<i64: 16, 128>}, {pipeline_mode = #tpu.pipeline_mode<synchronous>, transform_indices = @transform_2, window_bounds = array<i64: 1, 128>}, {pipeline_mode = #tpu.pipeline_mode<synchronous>, transform_indices = @transform_3, window_bounds = array<i64: 128, 64>}, {pipeline_mode = #tpu.pipeline_mode<synchronous>, transform_indices = @transform_4, window_bounds = array<i64: 1, 64>}, {pipeline_mode = #tpu.pipeline_mode<synchronous>, transform_indices = @transform_5, window_bounds = array<i64: 64, 4>}, {pipeline_mode = #tpu.pipeline_mode<synchronous>, transform_indices = @transform_6, window_bounds = array<i64: 1, 4>}, {transform_indices = @transform_7, window_bounds = array<i64: 512, 4>}]} {
    %c0 = arith.constant 0 : index
    %c0_0 = arith.constant 0 : index
    %0 = vector.load %arg1[%c0, %c0_0] : memref<512x16xf32, #tpu.memory_space<vmem>>, vector<512x16xf32>
    %1 = arith.truncf %0 : vector<512x16xf32> to vector<512x16xbf16>
    %c0_1 = arith.constant 0 : index
    %c0_2 = arith.constant 0 : index
    %2 = vector.load %arg2[%c0_1, %c0_2] : memref<16x128xbf16, #tpu.memory_space<vmem>>, vector<16x128xbf16>
    %cst = arith.constant dense<0.000000e+00> : vector<512x128xf32>
    %3 = tpu.matmul %1, %2, %cst {dimension_numbers = #tpu.dot_dimension_numbers<[1], [0], [0], [1], [0, 0, 1, 1], [], []>} : vector<512x16xbf16>, vector<16x128xbf16>, vector<512x128xf32> -> vector<512x128xf32>
    %c0_3 = arith.constant 0 : index
    %c0_4 = arith.constant 0 : index
    %4 = vector.load %arg3[%c0_3, %c0_4] : memref<1x128xf32, #tpu.memory_space<vmem>>, vector<1x128xf32>
    %5 = vector.broadcast %4 : vector<1x128xf32> to vector<512x128xf32>
    %6 = arith.addf %3, %5 : vector<512x128xf32>
    %cst_5 = arith.constant 0.000000e+00 : f32
    %7 = vector.broadcast %cst_5 : f32 to vector<512x128xf32>
    %8 = arith.maximumf %6, %7 : vector<512x128xf32>
    %9 = arith.truncf %8 : vector<512x128xf32> to vector<512x128xbf16>
    %c0_6 = arith.constant 0 : index
    %c0_7 = arith.constant 0 : index
    %10 = vector.load %arg4[%c0_6, %c0_7] : memref<128x64xbf16, #tpu.memory_space<vmem>>, vector<128x64xbf16>
    %cst_8 = arith.constant dense<0.000000e+00> : vector<512x64xf32>
    %11 = tpu.matmul %9, %10, %cst_8 {dimension_numbers = #tpu.dot_dimension_numbers<[1], [0], [0], [1], [0, 0, 1, 1], [], []>} : vector<512x128xbf16>, vector<128x64xbf16>, vector<512x64xf32> -> vector<512x64xf32>
    %c0_9 = arith.constant 0 : index
    %c0_10 = arith.constant 0 : index
    %12 = vector.load %arg5[%c0_9, %c0_10] : memref<1x64xf32, #tpu.memory_space<vmem>>, vector<1x64xf32>
    %13 = vector.broadcast %12 : vector<1x64xf32> to vector<512x64xf32>
    %14 = arith.addf %11, %13 : vector<512x64xf32>
    %cst_11 = arith.constant 0.000000e+00 : f32
    %15 = vector.broadcast %cst_11 : f32 to vector<512x64xf32>
    %16 = arith.maximumf %14, %15 : vector<512x64xf32>
    %17 = arith.truncf %16 : vector<512x64xf32> to vector<512x64xbf16>
    %c0_12 = arith.constant 0 : index
    %c0_13 = arith.constant 0 : index
    %18 = vector.load %arg6[%c0_12, %c0_13] : memref<64x4xbf16, #tpu.memory_space<vmem>>, vector<64x4xbf16>
    %cst_14 = arith.constant dense<0.000000e+00> : vector<512x4xf32>
    %19 = tpu.matmul %17, %18, %cst_14 {dimension_numbers = #tpu.dot_dimension_numbers<[1], [0], [0], [1], [0, 0, 1, 1], [], []>} : vector<512x64xbf16>, vector<64x4xbf16>, vector<512x4xf32> -> vector<512x4xf32>
    %c0_15 = arith.constant 0 : index
    %c0_16 = arith.constant 0 : index
    %20 = vector.load %arg7[%c0_15, %c0_16] : memref<1x4xf32, #tpu.memory_space<vmem>>, vector<1x4xf32>
    %21 = vector.broadcast %20 : vector<1x4xf32> to vector<512x4xf32>
    %22 = arith.addf %19, %21 : vector<512x4xf32>
    %c0_17 = arith.constant 0 : index
    %c0_18 = arith.constant 0 : index
    %23 = vector.load %arg8[%c0_17, %c0_18] : memref<512x4xf32, #tpu.memory_space<vmem>>, vector<512x4xf32>
    tpu.vector_store %arg8[%c0_17, %c0_18], %22 {strides = array<i32>} : memref<512x4xf32, #tpu.memory_space<vmem>>, vector<512x4xf32>,
    return
  }
  func.func @transform_0(%arg0: i32) -> (i32, i32) {
    %c0_i32 = arith.constant 0 : i32
    %c0_i32_0 = arith.constant 0 : i32
    return %arg0, %c0_i32 : i32, i32
  }
  func.func @transform_1(%arg0: i32) -> (i32, i32) {
    %c0_i32 = arith.constant 0 : i32
    %c0_i32_0 = arith.constant 0 : i32
    %c0_i32_1 = arith.constant 0 : i32
    return %c0_i32, %c0_i32_0 : i32, i32
  }
  func.func @transform_2(%arg0: i32) -> (i32, i32) {
    %c0_i32 = arith.constant 0 : i32
    %c0_i32_0 = arith.constant 0 : i32
    %c0_i32_1 = arith.constant 0 : i32
    return %c0_i32, %c0_i32_0 : i32, i32
  }
  func.func @transform_3(%arg0: i32) -> (i32, i32) {
    %c0_i32 = arith.constant 0 : i32
    %c0_i32_0 = arith.constant 0 : i32
    %c0_i32_1 = arith.constant 0 : i32
    return %c0_i32, %c0_i32_0 : i32, i32
  }
  func.func @transform_4(%arg0: i32) -> (i32, i32) {
    %c0_i32 = arith.constant 0 : i32
    %c0_i32_0 = arith.constant 0 : i32
    %c0_i32_1 = arith.constant 0 : i32
    return %c0_i32, %c0_i32_0 : i32, i32
  }
  func.func @transform_5(%arg0: i32) -> (i32, i32) {
    %c0_i32 = arith.constant 0 : i32
    %c0_i32_0 = arith.constant 0 : i32
    %c0_i32_1 = arith.constant 0 : i32
    return %c0_i32, %c0_i32_0 : i32, i32
  }
  func.func @transform_6(%arg0: i32) -> (i32, i32) {
    %c0_i32 = arith.constant 0 : i32
    %c0_i32_0 = arith.constant 0 : i32
    %c0_i32_1 = arith.constant 0 : i32
    return %c0_i32, %c0_i32_0 : i32, i32
  }
  func.func @transform_7(%arg0: i32) -> (i32, i32) {
    %c0_i32 = arith.constant 0 : i32
    %c0_i32_0 = arith.constant 0 : i32
    return %arg0, %c0_i32 : i32, i32
  }
}

</mosaic_0001>

<llo_original>
// kernel: dqn_forward.1
$region0: #{dqn_forward.1}
  #allocation0 [shape = 'u32[]', space=smem, size = 0x4, offset = 0x4, fixed_abs, tag = 'smem constant byte address 0x4 - core index']
  #allocation1 [shape = 'u32[144,128]{1,0:T(1,128)}', space=vmem, size = 0x12000, scoped, tag = 'internal scratch']
  %s0 = inlined_call_operand.vmem [shape: f32[512,16], index: 0, kind: input, shape index: {}]
  %s1 = inlined_call_operand.vmem [shape: bf16[16,128], index: 1, kind: input, shape index: {}]
  %s2 = inlined_call_operand.vmem [shape: f32[1,128], index: 2, kind: input, shape index: {}]
  %s3 = inlined_call_operand.vmem [shape: bf16[128,64], index: 3, kind: input, shape index: {}]
  %s4 = inlined_call_operand.vmem [shape: f32[1,64], index: 4, kind: input, shape index: {}]
  %s5 = inlined_call_operand.vmem [shape: bf16[64,4], index: 5, kind: input, shape index: {}]
  %s6 = inlined_call_operand.vmem [shape: f32[1,4], index: 6, kind: input, shape index: {}]
  %s7 = inlined_call_operand.vmem [shape: f32[512,4], index: 7, kind: output, shape index: {}]
  %s8 = sld [smem:[#allocation0]]
  $region38: #{dqn_forward.1} parent=0
    _
  %s10 = ssub.s32 1, %s8
  %s11 = scalar_select 0, %s10, %s8
  // Predicated region
  $region2: #{dqn_forward.1} parent=0 // pred_check
    _
  $region3: #{dqn_forward.1} parent=0 // pred_check_branch
    %13 = sbr.rel (0) target = $region5
  $region4: #{dqn_forward.1} parent=0 // pred_region
    _
  $region5: #{dqn_forward.1} parent=0 // pred_fallthru
    _
  // Predicated region
  $region6: #{dqn_forward.1} parent=0 // pred_check
    _
  $region7: #{dqn_forward.1} parent=0 // pred_check_branch
    %15 = sbr.rel (0) target = $region9
  $region8: #{dqn_forward.1} parent=0 // pred_region
    _
  $region9: #{dqn_forward.1} parent=0 // pred_fallthru
    _
  // Predicated region
  $region10: #{dqn_forward.1} parent=0 // pred_check
    _
  $region11: #{dqn_forward.1} parent=0 // pred_check_branch
    %17 = sbr.rel (0) target = $region13
  $region12: #{dqn_forward.1} parent=0 // pred_region
    _
  $region13: #{dqn_forward.1} parent=0 // pred_fallthru
    _
  // Predicated region
  $region14: #{dqn_forward.1} parent=0 // pred_check
    _
  $region15: #{dqn_forward.1} parent=0 // pred_check_branch
    %19 = sbr.rel (0) target = $region17
  $region16: #{dqn_forward.1} parent=0 // pred_region
    _
  $region17: #{dqn_forward.1} parent=0 // pred_fallthru
    _
  // Predicated region
  $region18: #{dqn_forward.1} parent=0 // pred_check
    _
  $region19: #{dqn_forward.1} parent=0 // pred_check_branch
    %21 = sbr.rel (0) target = $region21
  $region20: #{dqn_forward.1} parent=0 // pred_region
    _
  $region21: #{dqn_forward.1} parent=0 // pred_fallthru
    _
  // Predicated region
  $region22: #{dqn_forward.1} parent=0 // pred_check
    _
  $region23: #{dqn_forward.1} parent=0 // pred_check_branch
    %23 = sbr.rel (0) target = $region25
  $region24: #{dqn_forward.1} parent=0 // pred_region
    _
  $region25: #{dqn_forward.1} parent=0 // pred_fallthru
    _
  // Predicated region
  $region26: #{dqn_forward.1} parent=0 // pred_check
    _
  $region27: #{dqn_forward.1} parent=0 // pred_check_branch
    %25 = sbr.rel (0) target = $region29
  $region28: #{dqn_forward.1} parent=0 // pred_region
    _
  $region29: #{dqn_forward.1} parent=0 // pred_fallthru
    _
  %v27 = vld [vmem:[%s0] sm:$0xff]
  %v28 = vld [vmem:[%s0 + $0x8] sm:$0xff]
  %v29 = vld [vmem:[%s0 + $0x10] sm:$0xff]
  %v30 = vld [vmem:[%s0 + $0x18] sm:$0xff]
  %v31 = vld [vmem:[%s0 + $0x20] sm:$0xff]
  %v32 = vld [vmem:[%s0 + $0x28] sm:$0xff]
  %v33 = vld [vmem:[%s0 + $0x30] sm:$0xff]
  %v34 = vld [vmem:[%s0 + $0x38] sm:$0xff]
  %v35 = vld [vmem:[%s0 + $0x40] sm:$0xff]
  %v36 = vld [vmem:[%s0 + $0x48] sm:$0xff]
  %v37 = vld [vmem:[%s0 + $0x50] sm:$0xff]
  %v38 = vld [vmem:[%s0 + $0x58] sm:$0xff]
  %v39 = vld [vmem:[%s0 + $0x60] sm:$0xff]
  %v40 = vld [vmem:[%s0 + $0x68] sm:$0xff]
  %v41 = vld [vmem:[%s0 + $0x70] sm:$0xff]
  %v42 = vld [vmem:[%s0 + $0x78] sm:$0xff]
  %v43 = vld [vmem:[%s0 + $0x80] sm:$0xff]
  %v44 = vld [vmem:[%s0 + $0x88] sm:$0xff]
  %v45 = vld [vmem:[%s0 + $0x90] sm:$0xff]
  %v46 = vld [vmem:[%s0 + $0x98] sm:$0xff]
  %v47 = vld [vmem:[%s0 + $0xa0] sm:$0xff]
  %v48 = vld [vmem:[%s0 + $0xa8] sm:$0xff]
  %v49 = vld [vmem:[%s0 + $0xb0] sm:$0xff]
  %v50 = vld [vmem:[%s0 + $0xb8] sm:$0xff]
  %v51 = vld [vmem:[%s0 + $0xc0] sm:$0xff]
  %v52 = vld [vmem:[%s0 + $0xc8] sm:$0xff]
  %v53 = vld [vmem:[%s0 + $0xd0] sm:$0xff]
  %v54 = vld [vmem:[%s0 + $0xd8] sm:$0xff]
  %v55 = vld [vmem:[%s0 + $0xe0] sm:$0xff]
  %v56 = vld [vmem:[%s0 + $0xe8] sm:$0xff]
  %v57 = vld [vmem:[%s0 + $0xf0] sm:$0xff]
  %v58 = vld [vmem:[%s0 + $0xf8] sm:$0xff]
  %v59 = vld [vmem:[%s0 + $0x100] sm:$0xff]
  %v60 = vld [vmem:[%s0 + $0x108] sm:$0xff]
  %v61 = vld [vmem:[%s0 + $0x110] sm:$0xff]
  %v62 = vld [vmem:[%s0 + $0x118] sm:$0xff]
  %v63 = vld [vmem:[%s0 + $0x120] sm:$0xff]
  %v64 = vld [vmem:[%s0 + $0x128] sm:$0xff]
  %v65 = vld [vmem:[%s0 + $0x130] sm:$0xff]
  %v66 = vld [vmem:[%s0 + $0x138] sm:$0xff]
  %v67 = vld [vmem:[%s0 + $0x140] sm:$0xff]
  %v68 = vld [vmem:[%s0 + $0x148] sm:$0xff]
  %v69 = vld [vmem:[%s0 + $0x150] sm:$0xff]
  %v70 = vld [vmem:[%s0 + $0x158] sm:$0xff]
  %v71 = vld [vmem:[%s0 + $0x160] sm:$0xff]
  %v72 = vld [vmem:[%s0 + $0x168] sm:$0xff]
  %v73 = vld [vmem:[%s0 + $0x170] sm:$0xff]
  %v74 = vld [vmem:[%s0 + $0x178] sm:$0xff]
  %v75 = vld [vmem:[%s0 + $0x180] sm:$0xff]
  %v76 = vld [vmem:[%s0 + $0x188] sm:$0xff]
  %v77 = vld [vmem:[%s0 + $0x190] sm:$0xff]
  %v78 = vld [vmem:[%s0 + $0x198] sm:$0xff]
  %v79 = vld [vmem:[%s0 + $0x1a0] sm:$0xff]
  %v80 = vld [vmem:[%s0 + $0x1a8] sm:$0xff]
  %v81 = vld [vmem:[%s0 + $0x1b0] sm:$0xff]
  %v82 = vld [vmem:[%s0 + $0x1b8] sm:$0xff]
  %v83 = vld [vmem:[%s0 + $0x1c0] sm:$0xff]
  %v84 = vld [vmem:[%s0 + $0x1c8] sm:$0xff]
  %v85 = vld [vmem:[%s0 + $0x1d0] sm:$0xff]
  %v86 = vld [vmem:[%s0 + $0x1d8] sm:$0xff]
  %v87 = vld [vmem:[%s0 + $0x1e0] sm:$0xff]
  %v88 = vld [vmem:[%s0 + $0x1e8] sm:$0xff]
  %v89 = vld [vmem:[%s0 + $0x1f0] sm:$0xff]
  %v90 = vld [vmem:[%s0 + $0x1f8] sm:$0xff]
  %v91 = vpack.c.bf16 %v28, %v27
  %v92 = vpack.c.bf16 %v30, %v29
  %v93 = vpack.c.bf16 %v32, %v31
  %v94 = vpack.c.bf16 %v34, %v33
  %v95 = vpack.c.bf16 %v36, %v35
  %v96 = vpack.c.bf16 %v38, %v37
  %v97 = vpack.c.bf16 %v40, %v39
  %v98 = vpack.c.bf16 %v42, %v41
  %v99 = vpack.c.bf16 %v44, %v43
  %v100 = vpack.c.bf16 %v46, %v45
  %v101 = vpack.c.bf16 %v48, %v47
  %v102 = vpack.c.bf16 %v50, %v49
  %v103 = vpack.c.bf16 %v52, %v51
  %v104 = vpack.c.bf16 %v54, %v53
  %v105 = vpack.c.bf16 %v56, %v55
  %v106 = vpack.c.bf16 %v58, %v57
  %v107 = vpack.c.bf16 %v60, %v59
  %v108 = vpack.c.bf16 %v62, %v61
  %v109 = vpack.c.bf16 %v64, %v63
  %v110 = vpack.c.bf16 %v66, %v65
  %v111 = vpack.c.bf16 %v68, %v67
  %v112 = vpack.c.bf16 %v70, %v69
  %v113 = vpack.c.bf16 %v72, %v71
  %v114 = vpack.c.bf16 %v74, %v73
  %v115 = vpack.c.bf16 %v76, %v75
  %v116 = vpack.c.bf16 %v78, %v77
  %v117 = vpack.c.bf16 %v80, %v79
  %v118 = vpack.c.bf16 %v82, %v81
  %v119 = vpack.c.bf16 %v84, %v83
  %v120 = vpack.c.bf16 %v86, %v85
  %v121 = vpack.c.bf16 %v88, %v87
  %v122 = vpack.c.bf16 %v90, %v89
  %v123 = vld [vmem:[%s1] sm:$0xf]
  %v124 = vld [vmem:[%s1 + $0x4] sm:$0xf]
  %v125 = vld [vmem:[%s2] sm:$0x1]
  %v127 = vlaneseq
  %v128 = vshrl.u32 %v127, 7
  %v129 = vsub.s32 0, %v128
  %v130 = vrot.slane %v125, %v129
  %v134 = vunpack.c.l.b16 %v123
  %v135 = vunpack.c.l.b16 %v124
  %v136 = vpack.c.b16 %v135, %v134
  %vm138 = vcmask 130048
  %v140 = vsel %vm138, %v91, 0
  %v143 = vsel %vm138, %v92, 0
  %v146 = vsel %vm138, %v93, 0
  %v149 = vsel %vm138, %v94, 0
  %v152 = vsel %vm138, %v95, 0
  %v155 = vsel %vm138, %v96, 0
  %v158 = vsel %vm138, %v97, 0
  %v161 = vsel %vm138, %v98, 0
  %v164 = vsel %vm138, %v99, 0
  %v167 = vsel %vm138, %v100, 0
  %v170 = vsel %vm138, %v101, 0
  %v173 = vsel %vm138, %v102, 0
  %v176 = vsel %vm138, %v103, 0
  %v179 = vsel %vm138, %v104, 0
  %v182 = vsel %vm138, %v105, 0
  %v185 = vsel %vm138, %v106, 0
  %v188 = vsel %vm138, %v107, 0
  %v191 = vsel %vm138, %v108, 0
  %v194 = vsel %vm138, %v109, 0
  %v197 = vsel %vm138, %v110, 0
  %v200 = vsel %vm138, %v111, 0
  %v203 = vsel %vm138, %v112, 0
  %v206 = vsel %vm138, %v113, 0
  %v209 = vsel %vm138, %v114, 0
  %v212 = vsel %vm138, %v115, 0
  %v215 = vsel %vm138, %v116, 0
  %v218 = vsel %vm138, %v117, 0
  %v221 = vsel %vm138, %v118, 0
  %v224 = vsel %vm138, %v119, 0
  %v227 = vsel %vm138, %v120, 0
  %v230 = vsel %vm138, %v121, 0
  %v233 = vsel %vm138, %v122, 0
  %235 = vmatprep.subr.bf16.mxu0 0
  %236 = vmatpush1.bf16.msra.mxu0 %v136
  %237 = vmatprep.subr.bf16.mxu0 0
  %238 = vmatpush1.bf16.msra.mxu0 0
  %239 = vmatprep.subr.bf16.mxu0 0
  %240 = vmatpush1.bf16.msra.mxu0 0
  %241 = vmatprep.subr.bf16.mxu0 0
  %242 = vmatpush1.bf16.msra.mxu0 0
  %243 = vmatprep.subr.bf16.mxu0 0
  %244 = vmatpush1.bf16.msra.mxu0 0
  %245 = vmatprep.subr.bf16.mxu0 0
  %246 = vmatpush1.bf16.msra.mxu0 0
  %247 = vmatprep.subr.bf16.mxu0 0
  %248 = vmatpush1.bf16.msra.mxu0 0
  %249 = vmatprep.subr.bf16.mxu0 0
  %250 = vmatpush1.bf16.msra.mxu0 0
  %251 = vmatprep.subr.bf16.mxu0 0
  %252 = vmatpush1.bf16.msra.mxu0 0
  %253 = vmatprep.subr.bf16.mxu0 0
  %254 = vmatpush1.bf16.msra.mxu0 0
  %255 = vmatprep.subr.bf16.mxu0 0
  %256 = vmatpush1.bf16.msra.mxu0 0
  %257 = vmatprep.subr.bf16.mxu0 0
  %258 = vmatpush1.bf16.msra.mxu0 0
  %259 = vmatprep.subr.bf16.mxu0 0
  %260 = vmatpush1.bf16.msra.mxu0 0
  %261 = vmatprep.subr.bf16.mxu0 0
  %262 = vmatpush1.bf16.msra.mxu0 0
  %263 = vmatprep.subr.bf16.mxu0 0
  %264 = vmatpush1.bf16.msra.mxu0 0
  %265 = vmatprep.subr.bf16.mxu0 0
  %266 = vmatpush1.bf16.msra.mxu0 0
  %267 = vmatprep.mubr.bf16.mxu0 0
  %268 = vmatmul.mubr.bf16.gmra.mrb[0].mxu0 %v140
  %v269 = vpop.f32.mrb[0].mxu0
  %v270 = vadd.f32 %v130, %v269
  %v271 = vpop.f32.mrb[0].mxu0
  %v272 = vpop.f32.mrb[0].mxu0
  %v273 = vadd.f32 %v130, %v272
  %v274 = vpop.f32.mrb[0].mxu0
  %275 = vmatprep.mubr.bf16.mxu0 0
  %276 = vmatmul.mubr.bf16.gmra.mrb[0].mxu0 %v143
  %v277 = vpop.f32.mrb[0].mxu0
  %v278 = vadd.f32 %v130, %v277
  %v279 = vpop.f32.mrb[0].mxu0
  %v280 = vpop.f32.mrb[0].mxu0
  %v281 = vadd.f32 %v130, %v280
  %v282 = vpop.f32.mrb[0].mxu0
  %283 = vmatprep.mubr.bf16.mxu0 0
  %284 = vmatmul.mubr.bf16.gmra.mrb[0].mxu0 %v146
  %v285 = vpop.f32.mrb[0].mxu0
  %v286 = vadd.f32 %v130, %v285
  %v287 = vpop.f32.mrb[0].mxu0
  %v288 = vpop.f32.mrb[0].mxu0
  %v289 = vadd.f32 %v130, %v288
  %v290 = vpop.f32.mrb[0].mxu0
  %291 = vmatprep.mubr.bf16.mxu0 0
  %292 = vmatmul.mubr.bf16.gmra.mrb[0].mxu0 %v149
  %v293 = vpop.f32.mrb[0].mxu0
  %v294 = vadd.f32 %v130, %v293
  %v295 = vpop.f32.mrb[0].mxu0
  %v296 = vpop.f32.mrb[0].mxu0
  %v297 = vadd.f32 %v130, %v296
  %v298 = vpop.f32.mrb[0].mxu0
  %299 = vmatprep.mubr.bf16.mxu0 0
  %300 = vmatmul.mubr.bf16.gmra.mrb[0].mxu0 %v152
  %v301 = vpop.f32.mrb[0].mxu0
  %v302 = vadd.f32 %v130, %v301
  %v303 = vpop.f32.mrb[0].mxu0
  %v304 = vpop.f32.mrb[0].mxu0
  %v305 = vadd.f32 %v130, %v304
  %v306 = vpop.f32.mrb[0].mxu0
  %307 = vmatprep.mubr.bf16.mxu0 0
  %308 = vmatmul.mubr.bf16.gmra.mrb[0].mxu0 %v155
  %v309 = vpop.f32.mrb[0].mxu0
  %v310 = vadd.f32 %v130, %v309
  %v311 = vpop.f32.mrb[0].mxu0
  %v312 = vpop.f32.mrb[0].mxu0
  %v313 = vadd.f32 %v130, %v312
  %v314 = vpop.f32.mrb[0].mxu0
  %315 = vmatprep.mubr.bf16.mxu0 0
  %316 = vmatmul.mubr.bf16.gmra.mrb[0].mxu0 %v158
  %v317 = vpop.f32.mrb[0].mxu0
  %v318 = vadd.f32 %v130, %v317
  %v319 = vpop.f32.mrb[0].mxu0
  %v320 = vpop.f32.mrb[0].mxu0
  %v321 = vadd.f32 %v130, %v320
  %v322 = vpop.f32.mrb[0].mxu0
  %323 = vmatprep.mubr.bf16.mxu0 0
  %324 = vmatmul.mubr.bf16.gmra.mrb[0].mxu0 %v161
  %v325 = vpop.f32.mrb[0].mxu0
  %v326 = vadd.f32 %v130, %v325
  %v327 = vpop.f32.mrb[0].mxu0
  %v328 = vpop.f32.mrb[0].mxu0
  %v329 = vadd.f32 %v130, %v328
  %v330 = vpop.f32.mrb[0].mxu0
  %331 = vmatprep.mubr.bf16.mxu0 0
  %332 = vmatmul.mubr.bf16.gmra.mrb[0].mxu0 %v164
  %v333 = vpop.f32.mrb[0].mxu0
  %v334 = vadd.f32 %v130, %v333
  %v335 = vpop.f32.mrb[0].mxu0
  %v336 = vpop.f32.mrb[0].mxu0
  %v337 = vadd.f32 %v130, %v336
  %v338 = vpop.f32.mrb[0].mxu0
  %339 = vmatprep.mubr.bf16.mxu0 0
  %340 = vmatmul.mubr.bf16.gmra.mrb[0].mxu0 %v167
  %v341 = vpop.f32.mrb[0].mxu0
  %v342 = vadd.f32 %v130, %v341
  %v343 = vpop.f32.mrb[0].mxu0
  %v344 = vpop.f32.mrb[0].mxu0
  %v345 = vadd.f32 %v130, %v344
  %v346 = vpop.f32.mrb[0].mxu0
  %347 = vmatprep.mubr.bf16.mxu0 0
  %348 = vmatmul.mubr.bf16.gmra.mrb[0].mxu0 %v170
  %v349 = vpop.f32.mrb[0].mxu0
  %v350 = vadd.f32 %v130, %v349
  %v351 = vpop.f32.mrb[0].mxu0
  %v352 = vpop.f32.mrb[0].mxu0
  %v353 = vadd.f32 %v130, %v352
  %v354 = vpop.f32.mrb[0].mxu0
  %355 = vmatprep.mubr.bf16.mxu0 0
  %356 = vmatmul.mubr.bf16.gmra.mrb[0].mxu0 %v173
  %v357 = vpop.f32.mrb[0].mxu0
  %v358 = vadd.f32 %v130, %v357
  %v359 = vpop.f32.mrb[0].mxu0
  %v360 = vpop.f32.mrb[0].mxu0
  %v361 = vadd.f32 %v130, %v360
  %v362 = vpop.f32.mrb[0].mxu0
  %363 = vmatprep.mubr.bf16.mxu0 0
  %364 = vmatmul.mubr.bf16.gmra.mrb[0].mxu0 %v176
  %v365 = vpop.f32.mrb[0].mxu0
  %v366 = vadd.f32 %v130, %v365
  %v367 = vpop.f32.mrb[0].mxu0
  %v368 = vpop.f32.mrb[0].mxu0
  %v369 = vadd.f32 %v130, %v368
  %v370 = vpop.f32.mrb[0].mxu0
  %371 = vmatprep.mubr.bf16.mxu0 0
  %372 = vmatmul.mubr.bf16.gmra.mrb[0].mxu0 %v179
  %v373 = vpop.f32.mrb[0].mxu0
  %v374 = vadd.f32 %v130, %v373
  %v375 = vpop.f32.mrb[0].mxu0
  %v376 = vpop.f32.mrb[0].mxu0
  %v377 = vadd.f32 %v130, %v376
  %v378 = vpop.f32.mrb[0].mxu0
  %379 = vmatprep.mubr.bf16.mxu0 0
  %380 = vmatmul.mubr.bf16.gmra.mrb[0].mxu0 %v182
  %v381 = vpop.f32.mrb[0].mxu0
  %v382 = vadd.f32 %v130, %v381
  %v383 = vpop.f32.mrb[0].mxu0
  %v384 = vpop.f32.mrb[0].mxu0
  %v385 = vadd.f32 %v130, %v384
  %v386 = vpop.f32.mrb[0].mxu0
  %387 = vmatprep.mubr.bf16.mxu0 0
  %388 = vmatmul.mubr.bf16.gmra.mrb[0].mxu0 %v185
  %v389 = vpop.f32.mrb[0].mxu0
  %v390 = vadd.f32 %v130, %v389
  %v391 = vpop.f32.mrb[0].mxu0
  %v392 = vpop.f32.mrb[0].mxu0
  %v393 = vadd.f32 %v130, %v392
  %v394 = vpop.f32.mrb[0].mxu0
  %395 = vmatprep.mubr.bf16.mxu0 0
  %396 = vmatmul.mubr.bf16.gmra.mrb[0].mxu0 %v188
  %v397 = vpop.f32.mrb[0].mxu0
  %v398 = vadd.f32 %v130, %v397
  %v399 = vpop.f32.mrb[0].mxu0
  %v400 = vpop.f32.mrb[0].mxu0
  %v401 = vadd.f32 %v130, %v400
  %v402 = vpop.f32.mrb[0].mxu0
  %403 = vmatprep.mubr.bf16.mxu0 0
  %404 = vmatmul.mubr.bf16.gmra.mrb[0].mxu0 %v191
  %v405 = vpop.f32.mrb[0].mxu0
  %v406 = vadd.f32 %v130, %v405
  %v407 = vpop.f32.mrb[0].mxu0
  %v408 = vpop.f32.mrb[0].mxu0
  %v409 = vadd.f32 %v130, %v408
  %v410 = vpop.f32.mrb[0].mxu0
  %411 = vmatprep.mubr.bf16.mxu0 0
  %412 = vmatmul.mubr.bf16.gmra.mrb[0].mxu0 %v194
  %v413 = vpop.f32.mrb[0].mxu0
  %v414 = vadd.f32 %v130, %v413
  %v415 = vpop.f32.mrb[0].mxu0
  %v416 = vpop.f32.mrb[0].mxu0
  %v417 = vadd.f32 %v130, %v416
  %v418 = vpop.f32.mrb[0].mxu0
  %419 = vmatprep.mubr.bf16.mxu0 0
  %420 = vmatmul.mubr.bf16.gmra.mrb[0].mxu0 %v197
  %v421 = vpop.f32.mrb[0].mxu0
  %v422 = vadd.f32 %v130, %v421
  %v423 = vpop.f32.mrb[0].mxu0
  %v424 = vpop.f32.mrb[0].mxu0
  %v425 = vadd.f32 %v130, %v424
  %v426 = vpop.f32.mrb[0].mxu0
  %427 = vmatprep.mubr.bf16.mxu0 0
  %428 = vmatmul.mubr.bf16.gmra.mrb[0].mxu0 %v200
  %v429 = vpop.f32.mrb[0].mxu0
  %v430 = vadd.f32 %v130, %v429
  %v431 = vpop.f32.mrb[0].mxu0
  %v432 = vpop.f32.mrb[0].mxu0
  %v433 = vadd.f32 %v130, %v432
  %v434 = vpop.f32.mrb[0].mxu0
  %435 = vmatprep.mubr.bf16.mxu0 0
  %436 = vmatmul.mubr.bf16.gmra.mrb[0].mxu0 %v203
  %v437 = vpop.f32.mrb[0].mxu0
  %v438 = vadd.f32 %v130, %v437
  %v439 = vpop.f32.mrb[0].mxu0
  %v440 = vpop.f32.mrb[0].mxu0
  %v441 = vadd.f32 %v130, %v440
  %v442 = vpop.f32.mrb[0].mxu0
  %443 = vmatprep.mubr.bf16.mxu0 0
  %444 = vmatmul.mubr.bf16.gmra.mrb[0].mxu0 %v206
  %v445 = vpop.f32.mrb[0].mxu0
  %v446 = vadd.f32 %v130, %v445
  %v447 = vpop.f32.mrb[0].mxu0
  %v448 = vpop.f32.mrb[0].mxu0
  %v449 = vadd.f32 %v130, %v448
  %v450 = vpop.f32.mrb[0].mxu0
  %451 = vmatprep.mubr.bf16.mxu0 0
  %452 = vmatmul.mubr.bf16.gmra.mrb[0].mxu0 %v209
  %v453 = vpop.f32.mrb[0].mxu0
  %v454 = vadd.f32 %v130, %v453
  %v455 = vpop.f32.mrb[0].mxu0
  %v456 = vpop.f32.mrb[0].mxu0
  %v457 = vadd.f32 %v130, %v456
  %v458 = vpop.f32.mrb[0].mxu0
  %459 = vmatprep.mubr.bf16.mxu0 0
  %460 = vmatmul.mubr.bf16.gmra.mrb[0].mxu0 %v212
  %v461 = vpop.f32.mrb[0].mxu0
  %v462 = vadd.f32 %v130, %v461
  %v463 = vpop.f32.mrb[0].mxu0
  %v464 = vpop.f32.mrb[0].mxu0
  %v465 = vadd.f32 %v130, %v464
  %v466 = vpop.f32.mrb[0].mxu0
  %467 = vmatprep.mubr.bf16.mxu0 0
  %468 = vmatmul.mubr.bf16.gmra.mrb[0].mxu0 %v215
  %v469 = vpop.f32.mrb[0].mxu0
  %v470 = vadd.f32 %v130, %v469
  %v471 = vpop.f32.mrb[0].mxu0
  %v472 = vpop.f32.mrb[0].mxu0
  %v473 = vadd.f32 %v130, %v472
  %v474 = vpop.f32.mrb[0].mxu0
  %475 = vmatprep.mubr.bf16.mxu0 0
  %476 = vmatmul.mubr.bf16.gmra.mrb[0].mxu0 %v218
  %v477 = vpop.f32.mrb[0].mxu0
  %v478 = vadd.f32 %v130, %v477
  %v479 = vpop.f32.mrb[0].mxu0
  %v480 = vpop.f32.mrb[0].mxu0
  %v481 = vadd.f32 %v130, %v480
  %v482 = vpop.f32.mrb[0].mxu0
  %483 = vmatprep.mubr.bf16.mxu0 0
  %484 = vmatmul.mubr.bf16.gmra.mrb[0].mxu0 %v221
  %v485 = vpop.f32.mrb[0].mxu0
  %v486 = vadd.f32 %v130, %v485
  %v487 = vpop.f32.mrb[0].mxu0
  %v488 = vpop.f32.mrb[0].mxu0
  %v489 = vadd.f32 %v130, %v488
  %v490 = vpop.f32.mrb[0].mxu0
  %491 = vmatprep.mubr.bf16.mxu0 0
  %492 = vmatmul.mubr.bf16.gmra.mrb[0].mxu0 %v224
  %v493 = vpop.f32.mrb[0].mxu0
  %v494 = vadd.f32 %v130, %v493
  %v495 = vpop.f32.mrb[0].mxu0
  %v496 = vpop.f32.mrb[0].mxu0
  %v497 = vadd.f32 %v130, %v496
  %v498 = vpop.f32.mrb[0].mxu0
  %499 = vmatprep.mubr.bf16.mxu0 0
  %500 = vmatmul.mubr.bf16.gmra.mrb[0].mxu0 %v227
  %v501 = vpop.f32.mrb[0].mxu0
  %v502 = vadd.f32 %v130, %v501
  %v503 = vpop.f32.mrb[0].mxu0
  %v504 = vpop.f32.mrb[0].mxu0
  %v505 = vadd.f32 %v130, %v504
  %v506 = vpop.f32.mrb[0].mxu0
  %507 = vmatprep.mubr.bf16.mxu0 0
  %508 = vmatmul.mubr.bf16.gmra.mrb[0].mxu0 %v230
  %v509 = vpop.f32.mrb[0].mxu0
  %v510 = vadd.f32 %v130, %v509
  %v511 = vpop.f32.mrb[0].mxu0
  %v512 = vpop.f32.mrb[0].mxu0
  %v513 = vadd.f32 %v130, %v512
  %v514 = vpop.f32.mrb[0].mxu0
  %515 = vmatprep.mubr.bf16.mxu0 0
  %516 = vmatmul.mubr.bf16.gmra.mrb[0].mxu0 %v233
  %v517 = vpop.f32.mrb[0].mxu0
  %v518 = vadd.f32 %v130, %v517
  %v519 = vpop.f32.mrb[0].mxu0
  %v520 = vpop.f32.mrb[0].mxu0
  %v521 = vadd.f32 %v130, %v520
  %v522 = vpop.f32.mrb[0].mxu0
  %523 = vdwg.mxu0
  %v524 = vmax.f32 %v270, 0.0
  %v525 = vmax.f32 %v273, 0.0
  %v526 = vmax.f32 %v278, 0.0
  %v527 = vmax.f32 %v281, 0.0
  %v528 = vmax.f32 %v286, 0.0
  %v529 = vmax.f32 %v289, 0.0
  %v530 = vmax.f32 %v294, 0.0
  %v531 = vmax.f32 %v297, 0.0
  %v532 = vmax.f32 %v302, 0.0
  %v533 = vmax.f32 %v305, 0.0
  %v534 = vmax.f32 %v310, 0.0
  %v535 = vmax.f32 %v313, 0.0
  %v536 = vmax.f32 %v318, 0.0
  %v537 = vmax.f32 %v321, 0.0
  %v538 = vmax.f32 %v326, 0.0
  %v539 = vmax.f32 %v329, 0.0
  %v540 = vmax.f32 %v334, 0.0
  %v541 = vmax.f32 %v337, 0.0
  %v542 = vmax.f32 %v342, 0.0
  %v543 = vmax.f32 %v345, 0.0
  %v544 = vmax.f32 %v350, 0.0
  %v545 = vmax.f32 %v353, 0.0
  %v546 = vmax.f32 %v358, 0.0
  %v547 = vmax.f32 %v361, 0.0
  %v548 = vmax.f32 %v366, 0.0
  %v549 = vmax.f32 %v369, 0.0
  %v550 = vmax.f32 %v374, 0.0
  %v551 = vmax.f32 %v377, 0.0
  %v552 = vmax.f32 %v382, 0.0
  %v553 = vmax.f32 %v385, 0.0
  %v554 = vmax.f32 %v390, 0.0
  %v555 = vmax.f32 %v393, 0.0
  %v556 = vmax.f32 %v398, 0.0
  %v557 = vmax.f32 %v401, 0.0
  %v558 = vmax.f32 %v406, 0.0
  %v559 = vmax.f32 %v409, 0.0
  %v560 = vmax.f32 %v414, 0.0
  %v561 = vmax.f32 %v417, 0.0
  %v562 = vmax.f32 %v422, 0.0
  %v563 = vmax.f32 %v425, 0.0
  %v564 = vmax.f32 %v430, 0.0
  %v565 = vmax.f32 %v433, 0.0
  %v566 = vmax.f32 %v438, 0.0
  %v567 = vmax.f32 %v441, 0.0
  %v568 = vmax.f32 %v446, 0.0
  %v569 = vmax.f32 %v449, 0.0
  %v570 = vmax.f32 %v454, 0.0
  %v571 = vmax.f32 %v457, 0.0
  %v572 = vmax.f32 %v462, 0.0
  %v573 = vmax.f32 %v465, 0.0
  %v574 = vmax.f32 %v470, 0.0
  %v575 = vmax.f32 %v473, 0.0
  %v576 = vmax.f32 %v478, 0.0
  %v577 = vmax.f32 %v481, 0.0
  %v578 = vmax.f32 %v486, 0.0
  %v579 = vmax.f32 %v489, 0.0
  %v580 = vmax.f32 %v494, 0.0
  %v581 = vmax.f32 %v497, 0.0
  %v582 = vmax.f32 %v502, 0.0
  %v583 = vmax.f32 %v505, 0.0
  %v584 = vmax.f32 %v510, 0.0
  %v585 = vmax.f32 %v513, 0.0
  %v586 = vmax.f32 %v518, 0.0
  %v587 = vmax.f32 %v521, 0.0
  %v588 = vpack.c.bf16 %v525, %v524
  %v589 = vpack.c.bf16 %v527, %v526
  %v590 = vpack.c.bf16 %v529, %v528
  %v591 = vpack.c.bf16 %v531, %v530
  %v592 = vpack.c.bf16 %v533, %v532
  %v593 = vpack.c.bf16 %v535, %v534
  %v594 = vpack.c.bf16 %v537, %v536
  %v595 = vpack.c.bf16 %v539, %v538
  %v596 = vpack.c.bf16 %v541, %v540
  %v597 = vpack.c.bf16 %v543, %v542
  %v598 = vpack.c.bf16 %v545, %v544
  %v599 = vpack.c.bf16 %v547, %v546
  %v600 = vpack.c.bf16 %v549, %v548
  %v601 = vpack.c.bf16 %v551, %v550
  %v602 = vpack.c.bf16 %v553, %v552
  %v603 = vpack.c.bf16 %v555, %v554
  %v604 = vpack.c.bf16 %v557, %v556
  %v605 = vpack.c.bf16 %v559, %v558
  %v606 = vpack.c.bf16 %v561, %v560
  %v607 = vpack.c.bf16 %v563, %v562
  %v608 = vpack.c.bf16 %v565, %v564
  %v609 = vpack.c.bf16 %v567, %v566
  %v610 = vpack.c.bf16 %v569, %v568
  %v611 = vpack.c.bf16 %v571, %v570
  %v612 = vpack.c.bf16 %v573, %v572
  %v613 = vpack.c.bf16 %v575, %v574
  %v614 = vpack.c.bf16 %v577, %v576
  %v615 = vpack.c.bf16 %v579, %v578
  %v616 = vpack.c.bf16 %v581, %v580
  %v617 = vpack.c.bf16 %v583, %v582
  %v618 = vpack.c.bf16 %v585, %v584
  %v619 = vpack.c.bf16 %v587, %v586
  %v620 = vld [vmem:[%s3] sm:$0xf]
  %v621 = vld [vmem:[%s3 + $0x4] sm:$0xf]
  %v622 = vld [vmem:[%s3 + $0x8] sm:$0xf]
  %v623 = vld [vmem:[%s3 + $0xc] sm:$0xf]
  %v624 = vld [vmem:[%s3 + $0x10] sm:$0xf]
  %v625 = vld [vmem:[%s3 + $0x14] sm:$0xf]
  %v626 = vld [vmem:[%s3 + $0x18] sm:$0xf]
  %v627 = vld [vmem:[%s3 + $0x1c] sm:$0xf]
  %v628 = vld [vmem:[%s3 + $0x20] sm:$0xf]
  %v629 = vld [vmem:[%s3 + $0x24] sm:$0xf]
  %v630 = vld [vmem:[%s3 + $0x28] sm:$0xf]
  %v631 = vld [vmem:[%s3 + $0x2c] sm:$0xf]
  %v632 = vld [vmem:[%s3 + $0x30] sm:$0xf]
  %v633 = vld [vmem:[%s3 + $0x34] sm:$0xf]
  %v634 = vld [vmem:[%s3 + $0x38] sm:$0xf]
  %v635 = vld [vmem:[%s3 + $0x3c] sm:$0xf]
  %v636 = vld [vmem:[%s4] sm:$0x1]
  %v638 = vlaneseq
  %v639 = vshrl.u32 %v638, 7
  %v640 = vsub.s32 0, %v639
  %v641 = vrot.slane %v636, %v640
  %v659 = vunpack.c.l.b16 %v620
  %v660 = vunpack.c.l.b16 %v621
  %v661 = vunpack.c.l.b16 %v622
  %v662 = vunpack.c.l.b16 %v623
  %v663 = vunpack.c.l.b16 %v624
  %v664 = vunpack.c.l.b16 %v625
  %v665 = vunpack.c.l.b16 %v626
  %v666 = vunpack.c.l.b16 %v627
  %v667 = vunpack.c.l.b16 %v628
  %v668 = vunpack.c.l.b16 %v629
  %v669 = vunpack.c.l.b16 %v630
  %v670 = vunpack.c.l.b16 %v631
  %v671 = vunpack.c.l.b16 %v632
  %v672 = vunpack.c.l.b16 %v633
  %v673 = vunpack.c.l.b16 %v634
  %v674 = vunpack.c.l.b16 %v635
  %v675 = vpack.c.b16 %v660, %v659
  %v676 = vpack.c.b16 %v662, %v661
  %v677 = vpack.c.b16 %v664, %v663
  %v678 = vpack.c.b16 %v666, %v665
  %v679 = vpack.c.b16 %v668, %v667
  %v680 = vpack.c.b16 %v670, %v669
  %v681 = vpack.c.b16 %v672, %v671
  %v682 = vpack.c.b16 %v674, %v673
  %691 = vmatprep.subr.bf16.mxu0 0
  %692 = vmatpush1.bf16.msra.mxu0 %v675
  %693 = vmatprep.subr.bf16.mxu0 0
  %694 = vmatpush1.bf16.msra.mxu0 %v676
  %695 = vmatprep.subr.bf16.mxu0 0
  %696 = vmatpush1.bf16.msra.mxu0 %v677
  %697 = vmatprep.subr.bf16.mxu0 0
  %698 = vmatpush1.bf16.msra.mxu0 %v678
  %699 = vmatprep.subr.bf16.mxu0 0
  %700 = vmatpush1.bf16.msra.mxu0 %v679
  %701 = vmatprep.subr.bf16.mxu0 0
  %702 = vmatpush1.bf16.msra.mxu0 %v680
  %703 = vmatprep.subr.bf16.mxu0 0
  %704 = vmatpush1.bf16.msra.mxu0 %v681
  %705 = vmatprep.subr.bf16.mxu0 0
  %706 = vmatpush1.bf16.msra.mxu0 %v682
  %707 = vmatprep.subr.bf16.mxu0 0
  %708 = vmatpush1.bf16.msra.mxu0 0
  %709 = vmatprep.subr.bf16.mxu0 0
  %710 = vmatpush1.bf16.msra.mxu0 0
  %711 = vmatprep.subr.bf16.mxu0 0
  %712 = vmatpush1.bf16.msra.mxu0 0
  %713 = vmatprep.subr.bf16.mxu0 0
  %714 = vmatpush1.bf16.msra.mxu0 0
  %715 = vmatprep.subr.bf16.mxu0 0
  %716 = vmatpush1.bf16.msra.mxu0 0
  %717 = vmatprep.subr.bf16.mxu0 0
  %718 = vmatpush1.bf16.msra.mxu0 0
  %719 = vmatprep.subr.bf16.mxu0 0
  %720 = vmatpush1.bf16.msra.mxu0 0
  %721 = vmatprep.subr.bf16.mxu0 0
  %722 = vmatpush1.bf16.msra.mxu0 0
  %723 = vmatprep.mubr.bf16.mxu0 0
  %724 = vmatmul.mubr.bf16.gmra.mrb[0].mxu0 %v588
  %v725 = vpop.f32.mrb[0].mxu0
  %v726 = vadd.f32 %v641, %v725
  %v727 = vpop.f32.mrb[0].mxu0
  %v728 = vpop.f32.mrb[0].mxu0
  %v729 = vadd.f32 %v641, %v728
  %v730 = vpop.f32.mrb[0].mxu0
  %731 = vmatprep.mubr.bf16.mxu0 0
  %732 = vmatmul.mubr.bf16.gmra.mrb[0].mxu0 %v589
  %v733 = vpop.f32.mrb[0].mxu0
  %v734 = vadd.f32 %v641, %v733
  %v735 = vpop.f32.mrb[0].mxu0
  %v736 = vpop.f32.mrb[0].mxu0
  %v737 = vadd.f32 %v641, %v736
  %v738 = vpop.f32.mrb[0].mxu0
  %739 = vmatprep.mubr.bf16.mxu0 0
  %740 = vmatmul.mubr.bf16.gmra.mrb[0].mxu0 %v590
  %v741 = vpop.f32.mrb[0].mxu0
  %v742 = vadd.f32 %v641, %v741
  %v743 = vpop.f32.mrb[0].mxu0
  %v744 = vpop.f32.mrb[0].mxu0
  %v745 = vadd.f32 %v641, %v744
  %v746 = vpop.f32.mrb[0].mxu0
  %747 = vmatprep.mubr.bf16.mxu0 0
  %748 = vmatmul.mubr.bf16.gmra.mrb[0].mxu0 %v591
  %v749 = vpop.f32.mrb[0].mxu0
  %v750 = vadd.f32 %v641, %v749
  %v751 = vpop.f32.mrb[0].mxu0
  %v752 = vpop.f32.mrb[0].mxu0
  %v753 = vadd.f32 %v641, %v752
  %v754 = vpop.f32.mrb[0].mxu0
  %755 = vmatprep.mubr.bf16.mxu0 0
  %756 = vmatmul.mubr.bf16.gmra.mrb[0].mxu0 %v592
  %v757 = vpop.f32.mrb[0].mxu0
  %v758 = vadd.f32 %v641, %v757
  %v759 = vpop.f32.mrb[0].mxu0
  %v760 = vpop.f32.mrb[0].mxu0
  %v761 = vadd.f32 %v641, %v760
  %v762 = vpop.f32.mrb[0].mxu0
  %763 = vmatprep.mubr.bf16.mxu0 0
  %764 = vmatmul.mubr.bf16.gmra.mrb[0].mxu0 %v593
  %v765 = vpop.f32.mrb[0].mxu0
  %v766 = vadd.f32 %v641, %v765
  %v767 = vpop.f32.mrb[0].mxu0
  %v768 = vpop.f32.mrb[0].mxu0
  %v769 = vadd.f32 %v641, %v768
  %v770 = vpop.f32.mrb[0].mxu0
  %771 = vmatprep.mubr.bf16.mxu0 0
  %772 = vmatmul.mubr.bf16.gmra.mrb[0].mxu0 %v594
  %v773 = vpop.f32.mrb[0].mxu0
  %v774 = vadd.f32 %v641, %v773
  %v775 = vpop.f32.mrb[0].mxu0
  %v776 = vpop.f32.mrb[0].mxu0
  %v777 = vadd.f32 %v641, %v776
  %v778 = vpop.f32.mrb[0].mxu0
  %779 = vmatprep.mubr.bf16.mxu0 0
  %780 = vmatmul.mubr.bf16.gmra.mrb[0].mxu0 %v595
  %v781 = vpop.f32.mrb[0].mxu0
  %v782 = vadd.f32 %v641, %v781
  %v783 = vpop.f32.mrb[0].mxu0
  %v784 = vpop.f32.mrb[0].mxu0
  %v785 = vadd.f32 %v641, %v784
  %v786 = vpop.f32.mrb[0].mxu0
  %787 = vmatprep.mubr.bf16.mxu0 0
  %788 = vmatmul.mubr.bf16.gmra.mrb[0].mxu0 %v596
  %v789 = vpop.f32.mrb[0].mxu0
  %v790 = vadd.f32 %v641, %v789
  %v791 = vpop.f32.mrb[0].mxu0
  %v792 = vpop.f32.mrb[0].mxu0
  %v793 = vadd.f32 %v641, %v792
  %v794 = vpop.f32.mrb[0].mxu0
  %795 = vmatprep.mubr.bf16.mxu0 0
  %796 = vmatmul.mubr.bf16.gmra.mrb[0].mxu0 %v597
  %v797 = vpop.f32.mrb[0].mxu0
  %v798 = vadd.f32 %v641, %v797
  %v799 = vpop.f32.mrb[0].mxu0
  %v800 = vpop.f32.mrb[0].mxu0
  %v801 = vadd.f32 %v641, %v800
  %v802 = vpop.f32.mrb[0].mxu0
  %803 = vmatprep.mubr.bf16.mxu0 0
  %804 = vmatmul.mubr.bf16.gmra.mrb[0].mxu0 %v598
  %v805 = vpop.f32.mrb[0].mxu0
  %v806 = vadd.f32 %v641, %v805
  %v807 = vpop.f32.mrb[0].mxu0
  %v808 = vpop.f32.mrb[0].mxu0
  %v809 = vadd.f32 %v641, %v808
  %v810 = vpop.f32.mrb[0].mxu0
  %811 = vmatprep.mubr.bf16.mxu0 0
  %812 = vmatmul.mubr.bf16.gmra.mrb[0].mxu0 %v599
  %v813 = vpop.f32.mrb[0].mxu0
  %v814 = vadd.f32 %v641, %v813
  %v815 = vpop.f32.mrb[0].mxu0
  %v816 = vpop.f32.mrb[0].mxu0
  %v817 = vadd.f32 %v641, %v816
  %v818 = vpop.f32.mrb[0].mxu0
  %819 = vmatprep.mubr.bf16.mxu0 0
  %820 = vmatmul.mubr.bf16.gmra.mrb[0].mxu0 %v600
  %v821 = vpop.f32.mrb[0].mxu0
  %v822 = vadd.f32 %v641, %v821
  %v823 = vpop.f32.mrb[0].mxu0
  %v824 = vpop.f32.mrb[0].mxu0
  %v825 = vadd.f32 %v641, %v824
  %v826 = vpop.f32.mrb[0].mxu0
  %827 = vmatprep.mubr.bf16.mxu0 0
  %828 = vmatmul.mubr.bf16.gmra.mrb[0].mxu0 %v601
  %v829 = vpop.f32.mrb[0].mxu0
  %v830 = vadd.f32 %v641, %v829
  %v831 = vpop.f32.mrb[0].mxu0
  %v832 = vpop.f32.mrb[0].mxu0
  %v833 = vadd.f32 %v641, %v832
  %v834 = vpop.f32.mrb[0].mxu0
  %835 = vmatprep.mubr.bf16.mxu0 0
  %836 = vmatmul.mubr.bf16.gmra.mrb[0].mxu0 %v602
  %v837 = vpop.f32.mrb[0].mxu0
  %v838 = vadd.f32 %v641, %v837
  %v839 = vpop.f32.mrb[0].mxu0
  %v840 = vpop.f32.mrb[0].mxu0
  %v841 = vadd.f32 %v641, %v840
  %v842 = vpop.f32.mrb[0].mxu0
  %843 = vmatprep.mubr.bf16.mxu0 0
  %844 = vmatmul.mubr.bf16.gmra.mrb[0].mxu0 %v603
  %v845 = vpop.f32.mrb[0].mxu0
  %v846 = vadd.f32 %v641, %v845
  %v847 = vpop.f32.mrb[0].mxu0
  %v848 = vpop.f32.mrb[0].mxu0
  %v849 = vadd.f32 %v641, %v848
  %v850 = vpop.f32.mrb[0].mxu0
  %851 = vmatprep.mubr.bf16.mxu0 0
  %852 = vmatmul.mubr.bf16.gmra.mrb[0].mxu0 %v604
  %v853 = vpop.f32.mrb[0].mxu0
  %v854 = vadd.f32 %v641, %v853
  %v855 = vpop.f32.mrb[0].mxu0
  %v856 = vpop.f32.mrb[0].mxu0
  %v857 = vadd.f32 %v641, %v856
  %v858 = vpop.f32.mrb[0].mxu0
  %859 = vmatprep.mubr.bf16.mxu0 0
  %860 = vmatmul.mubr.bf16.gmra.mrb[0].mxu0 %v605
  %v861 = vpop.f32.mrb[0].mxu0
  %v862 = vadd.f32 %v641, %v861
  %v863 = vpop.f32.mrb[0].mxu0
  %v864 = vpop.f32.mrb[0].mxu0
  %v865 = vadd.f32 %v641, %v864
  %v866 = vpop.f32.mrb[0].mxu0
  %867 = vmatprep.mubr.bf16.mxu0 0
  %868 = vmatmul.mubr.bf16.gmra.mrb[0].mxu0 %v606
  %v869 = vpop.f32.mrb[0].mxu0
  %v870 = vadd.f32 %v641, %v869
  %v871 = vpop.f32.mrb[0].mxu0
  %v872 = vpop.f32.mrb[0].mxu0
  %v873 = vadd.f32 %v641, %v872
  %v874 = vpop.f32.mrb[0].mxu0
  %875 = vmatprep.mubr.bf16.mxu0 0
  %876 = vmatmul.mubr.bf16.gmra.mrb[0].mxu0 %v607
  %v877 = vpop.f32.mrb[0].mxu0
  %v878 = vadd.f32 %v641, %v877
  %v879 = vpop.f32.mrb[0].mxu0
  %v880 = vpop.f32.mrb[0].mxu0
  %v881 = vadd.f32 %v641, %v880
  %v882 = vpop.f32.mrb[0].mxu0
  %883 = vmatprep.mubr.bf16.mxu0 0
  %884 = vmatmul.mubr.bf16.gmra.mrb[0].mxu0 %v608
  %v885 = vpop.f32.mrb[0].mxu0
  %v886 = vadd.f32 %v641, %v885
  %v887 = vpop.f32.mrb[0].mxu0
  %v888 = vpop.f32.mrb[0].mxu0
  %v889 = vadd.f32 %v641, %v888
  %v890 = vpop.f32.mrb[0].mxu0
  %891 = vmatprep.mubr.bf16.mxu0 0
  %892 = vmatmul.mubr.bf16.gmra.mrb[0].mxu0 %v609
  %v893 = vpop.f32.mrb[0].mxu0
  %v894 = vadd.f32 %v641, %v893
  %v895 = vpop.f32.mrb[0].mxu0
  %v896 = vpop.f32.mrb[0].mxu0
  %v897 = vadd.f32 %v641, %v896
  %v898 = vpop.f32.mrb[0].mxu0
  %899 = vmatprep.mubr.bf16.mxu0 0
  %900 = vmatmul.mubr.bf16.gmra.mrb[0].mxu0 %v610
  %v901 = vpop.f32.mrb[0].mxu0
  %v902 = vadd.f32 %v641, %v901
  %v903 = vpop.f32.mrb[0].mxu0
  %v904 = vpop.f32.mrb[0].mxu0
  %v905 = vadd.f32 %v641, %v904
  %v906 = vpop.f32.mrb[0].mxu0
  %907 = vmatprep.mubr.bf16.mxu0 0
  %908 = vmatmul.mubr.bf16.gmra.mrb[0].mxu0 %v611
  %v909 = vpop.f32.mrb[0].mxu0
  %v910 = vadd.f32 %v641, %v909
  %v911 = vpop.f32.mrb[0].mxu0
  %v912 = vpop.f32.mrb[0].mxu0
  %v913 = vadd.f32 %v641, %v912
  %v914 = vpop.f32.mrb[0].mxu0
  %915 = vmatprep.mubr.bf16.mxu0 0
  %916 = vmatmul.mubr.bf16.gmra.mrb[0].mxu0 %v612
  %v917 = vpop.f32.mrb[0].mxu0
  %v918 = vadd.f32 %v641, %v917
  %v919 = vpop.f32.mrb[0].mxu0
  %v920 = vpop.f32.mrb[0].mxu0
  %v921 = vadd.f32 %v641, %v920
  %v922 = vpop.f32.mrb[0].mxu0
  %923 = vmatprep.mubr.bf16.mxu0 0
  %924 = vmatmul.mubr.bf16.gmra.mrb[0].mxu0 %v613
  %v925 = vpop.f32.mrb[0].mxu0
  %v926 = vadd.f32 %v641, %v925
  %v927 = vpop.f32.mrb[0].mxu0
  %v928 = vpop.f32.mrb[0].mxu0
  %v929 = vadd.f32 %v641, %v928
  %v930 = vpop.f32.mrb[0].mxu0
  %931 = vmatprep.mubr.bf16.mxu0 0
  %932 = vmatmul.mubr.bf16.gmra.mrb[0].mxu0 %v614
  %v933 = vpop.f32.mrb[0].mxu0
  %v934 = vadd.f32 %v641, %v933
  %v935 = vpop.f32.mrb[0].mxu0
  %v936 = vpop.f32.mrb[0].mxu0
  %v937 = vadd.f32 %v641, %v936
  %v938 = vpop.f32.mrb[0].mxu0
  %939 = vmatprep.mubr.bf16.mxu0 0
  %940 = vmatmul.mubr.bf16.gmra.mrb[0].mxu0 %v615
  %v941 = vpop.f32.mrb[0].mxu0
  %v942 = vadd.f32 %v641, %v941
  %v943 = vpop.f32.mrb[0].mxu0
  %v944 = vpop.f32.mrb[0].mxu0
  %v945 = vadd.f32 %v641, %v944
  %v946 = vpop.f32.mrb[0].mxu0
  %947 = vmatprep.mubr.bf16.mxu0 0
  %948 = vmatmul.mubr.bf16.gmra.mrb[0].mxu0 %v616
  %v949 = vpop.f32.mrb[0].mxu0
  %v950 = vadd.f32 %v641, %v949
  %v951 = vpop.f32.mrb[0].mxu0
  %v952 = vpop.f32.mrb[0].mxu0
  %v953 = vadd.f32 %v641, %v952
  %v954 = vpop.f32.mrb[0].mxu0
  %955 = vmatprep.mubr.bf16.mxu0 0
  %956 = vmatmul.mubr.bf16.gmra.mrb[0].mxu0 %v617
  %v957 = vpop.f32.mrb[0].mxu0
  %v958 = vadd.f32 %v641, %v957
  %v959 = vpop.f32.mrb[0].mxu0
  %v960 = vpop.f32.mrb[0].mxu0
  %v961 = vadd.f32 %v641, %v960
  %v962 = vpop.f32.mrb[0].mxu0
  %963 = vmatprep.mubr.bf16.mxu0 0
  %964 = vmatmul.mubr.bf16.gmra.mrb[0].mxu0 %v618
  %v965 = vpop.f32.mrb[0].mxu0
  %v966 = vadd.f32 %v641, %v965
  %v967 = vpop.f32.mrb[0].mxu0
  %v968 = vpop.f32.mrb[0].mxu0
  %v969 = vadd.f32 %v641, %v968
  %v970 = vpop.f32.mrb[0].mxu0
  %971 = vmatprep.mubr.bf16.mxu0 0
  %972 = vmatmul.mubr.bf16.gmra.mrb[0].mxu0 %v619
  %v973 = vpop.f32.mrb[0].mxu0
  %v974 = vadd.f32 %v641, %v973
  %v975 = vpop.f32.mrb[0].mxu0
  %v976 = vpop.f32.mrb[0].mxu0
  %v977 = vadd.f32 %v641, %v976
  %v978 = vpop.f32.mrb[0].mxu0
  %979 = vdwg.mxu0
  %v980 = vmax.f32 %v726, 0.0
  %v981 = vmax.f32 %v729, 0.0
  %v982 = vmax.f32 %v734, 0.0
  %v983 = vmax.f32 %v737, 0.0
  %v984 = vmax.f32 %v742, 0.0
  %v985 = vmax.f32 %v745, 0.0
  %v986 = vmax.f32 %v750, 0.0
  %v987 = vmax.f32 %v753, 0.0
  %v988 = vmax.f32 %v758, 0.0
  %v989 = vmax.f32 %v761, 0.0
  %v990 = vmax.f32 %v766, 0.0
  %v991 = vmax.f32 %v769, 0.0
  %v992 = vmax.f32 %v774, 0.0
  %v993 = vmax.f32 %v777, 0.0
  %v994 = vmax.f32 %v782, 0.0
  %v995 = vmax.f32 %v785, 0.0
  %v996 = vmax.f32 %v790, 0.0
  %v997 = vmax.f32 %v793, 0.0
  %v998 = vmax.f32 %v798, 0.0
  %v999 = vmax.f32 %v801, 0.0
  %v1000 = vmax.f32 %v806, 0.0
  %v1001 = vmax.f32 %v809, 0.0
  %v1002 = vmax.f32 %v814, 0.0
  %v1003 = vmax.f32 %v817, 0.0
  %v1004 = vmax.f32 %v822, 0.0
  %v1005 = vmax.f32 %v825, 0.0
  %v1006 = vmax.f32 %v830, 0.0
  %v1007 = vmax.f32 %v833, 0.0
  %v1008 = vmax.f32 %v838, 0.0
  %v1009 = vmax.f32 %v841, 0.0
  %v1010 = vmax.f32 %v846, 0.0
  %v1011 = vmax.f32 %v849, 0.0
  %v1012 = vmax.f32 %v854, 0.0
  %v1013 = vmax.f32 %v857, 0.0
  %v1014 = vmax.f32 %v862, 0.0
  %v1015 = vmax.f32 %v865, 0.0
  %v1016 = vmax.f32 %v870, 0.0
  %v1017 = vmax.f32 %v873, 0.0
  %v1018 = vmax.f32 %v878, 0.0
  %v1019 = vmax.f32 %v881, 0.0
  %v1020 = vmax.f32 %v886, 0.0
  %v1021 = vmax.f32 %v889, 0.0
  %v1022 = vmax.f32 %v894, 0.0
  %v1023 = vmax.f32 %v897, 0.0
  %v1024 = vmax.f32 %v902, 0.0
  %v1025 = vmax.f32 %v905, 0.0
  %v1026 = vmax.f32 %v910, 0.0
  %v1027 = vmax.f32 %v913, 0.0
  %v1028 = vmax.f32 %v918, 0.0
  %v1029 = vmax.f32 %v921, 0.0
  %v1030 = vmax.f32 %v926, 0.0
  %v1031 = vmax.f32 %v929, 0.0
  %v1032 = vmax.f32 %v934, 0.0
  %v1033 = vmax.f32 %v937, 0.0
  %v1034 = vmax.f32 %v942, 0.0
  %v1035 = vmax.f32 %v945, 0.0
  %v1036 = vmax.f32 %v950, 0.0
  %v1037 = vmax.f32 %v953, 0.0
  %v1038 = vmax.f32 %v958, 0.0
  %v1039 = vmax.f32 %v961, 0.0
  %v1040 = vmax.f32 %v966, 0.0
  %v1041 = vmax.f32 %v969, 0.0
  %v1042 = vmax.f32 %v974, 0.0
  %v1043 = vmax.f32 %v977, 0.0
  %v1044 = vpack.c.bf16 %v981, %v980
  %v1045 = vpack.c.bf16 %v983, %v982
  %v1046 = vpack.c.bf16 %v985, %v984
  %v1047 = vpack.c.bf16 %v987, %v986
  %v1048 = vpack.c.bf16 %v989, %v988
  %v1049 = vpack.c.bf16 %v991, %v990
  %v1050 = vpack.c.bf16 %v993, %v992
  %v1051 = vpack.c.bf16 %v995, %v994
  %v1052 = vpack.c.bf16 %v997, %v996
  %v1053 = vpack.c.bf16 %v999, %v998
  %v1054 = vpack.c.bf16 %v1001, %v1000
  %v1055 = vpack.c.bf16 %v1003, %v1002
  %v1056 = vpack.c.bf16 %v1005, %v1004
  %v1057 = vpack.c.bf16 %v1007, %v1006
  %v1058 = vpack.c.bf16 %v1009, %v1008
  %v1059 = vpack.c.bf16 %v1011, %v1010
  %v1060 = vpack.c.bf16 %v1013, %v1012
  %v1061 = vpack.c.bf16 %v1015, %v1014
  %v1062 = vpack.c.bf16 %v1017, %v1016
  %v1063 = vpack.c.bf16 %v1019, %v1018
  %v1064 = vpack.c.bf16 %v1021, %v1020
  %v1065 = vpack.c.bf16 %v1023, %v1022
  %v1066 = vpack.c.bf16 %v1025, %v1024
  %v1067 = vpack.c.bf16 %v1027, %v1026
  %v1068 = vpack.c.bf16 %v1029, %v1028
  %v1069 = vpack.c.bf16 %v1031, %v1030
  %v1070 = vpack.c.bf16 %v1033, %v1032
  %v1071 = vpack.c.bf16 %v1035, %v1034
  %v1072 = vpack.c.bf16 %v1037, %v1036
  %v1073 = vpack.c.bf16 %v1039, %v1038
  %v1074 = vpack.c.bf16 %v1041, %v1040
  %v1075 = vpack.c.bf16 %v1043, %v1042
  %v1076 = vld [vmem:[%s5] sm:$0xf]
  %v1077 = vld [vmem:[%s5 + $0x4] sm:$0xf]
  %v1078 = vld [vmem:[%s5 + $0x8] sm:$0xf]
  %v1079 = vld [vmem:[%s5 + $0xc] sm:$0xf]
  %v1080 = vld [vmem:[%s5 + $0x10] sm:$0xf]
  %v1081 = vld [vmem:[%s5 + $0x14] sm:$0xf]
  %v1082 = vld [vmem:[%s5 + $0x18] sm:$0xf]
  %v1083 = vld [vmem:[%s5 + $0x1c] sm:$0xf]
  %v1084 = vld [vmem:[%s6] sm:$0x1]
  %v1086 = vlaneseq
  %v1087 = vshrl.u32 %v1086, 7
  %v1088 = vsub.s32 0, %v1087
  %v1089 = vrot.slane %v1084, %v1088
  %v1099 = vunpack.c.l.b16 %v1076
  %v1100 = vunpack.c.l.b16 %v1077
  %v1101 = vunpack.c.l.b16 %v1078
  %v1102 = vunpack.c.l.b16 %v1079
  %v1103 = vunpack.c.l.b16 %v1080
  %v1104 = vunpack.c.l.b16 %v1081
  %v1105 = vunpack.c.l.b16 %v1082
  %v1106 = vunpack.c.l.b16 %v1083
  %v1107 = vpack.c.b16 %v1100, %v1099
  %v1108 = vpack.c.b16 %v1102, %v1101
  %v1109 = vpack.c.b16 %v1104, %v1103
  %v1110 = vpack.c.b16 %v1106, %v1105
  %vm1115 = vcmask 523264
  %v1117 = vsel %vm1115, %v1044, 0
  %v1120 = vsel %vm1115, %v1045, 0
  %v1123 = vsel %vm1115, %v1046, 0
  %v1126 = vsel %vm1115, %v1047, 0
  %v1129 = vsel %vm1115, %v1048, 0
  %v1132 = vsel %vm1115, %v1049, 0
  %v1135 = vsel %vm1115, %v1050, 0
  %v1138 = vsel %vm1115, %v1051, 0
  %v1141 = vsel %vm1115, %v1052, 0
  %v1144 = vsel %vm1115, %v1053, 0
  %v1147 = vsel %vm1115, %v1054, 0
  %v1150 = vsel %vm1115, %v1055, 0
  %v1153 = vsel %vm1115, %v1056, 0
  %v1156 = vsel %vm1115, %v1057, 0
  %v1159 = vsel %vm1115, %v1058, 0
  %v1162 = vsel %vm1115, %v1059, 0
  %v1165 = vsel %vm1115, %v1060, 0
  %v1168 = vsel %vm1115, %v1061, 0
  %v1171 = vsel %vm1115, %v1062, 0
  %v1174 = vsel %vm1115, %v1063, 0
  %v1177 = vsel %vm1115, %v1064, 0
  %v1180 = vsel %vm1115, %v1065, 0
  %v1183 = vsel %vm1115, %v1066, 0
  %v1186 = vsel %vm1115, %v1067, 0
  %v1189 = vsel %vm1115, %v1068, 0
  %v1192 = vsel %vm1115, %v1069, 0
  %v1195 = vsel %vm1115, %v1070, 0
  %v1198 = vsel %vm1115, %v1071, 0
  %v1201 = vsel %vm1115, %v1072, 0
  %v1204 = vsel %vm1115, %v1073, 0
  %v1207 = vsel %vm1115, %v1074, 0
  %v1210 = vsel %vm1115, %v1075, 0
  %1212 = vmatprep.subr.bf16.mxu0 0
  %1213 = vmatpush1.bf16.msra.mxu0 %v1107
  %1214 = vmatprep.subr.bf16.mxu0 0
  %1215 = vmatpush1.bf16.msra.mxu0 %v1108
  %1216 = vmatprep.subr.bf16.mxu0 0
  %1217 = vmatpush1.bf16.msra.mxu0 %v1109
  %1218 = vmatprep.subr.bf16.mxu0 0
  %1219 = vmatpush1.bf16.msra.mxu0 %v1110
  %1220 = vmatprep.subr.bf16.mxu0 0
  %1221 = vmatpush1.bf16.msra.mxu0 0
  %1222 = vmatprep.subr.bf16.mxu0 0
  %1223 = vmatpush1.bf16.msra.mxu0 0
  %1224 = vmatprep.subr.bf16.mxu0 0
  %1225 = vmatpush1.bf16.msra.mxu0 0
  %1226 = vmatprep.subr.bf16.mxu0 0
  %1227 = vmatpush1.bf16.msra.mxu0 0
  %1228 = vmatprep.subr.bf16.mxu0 0
  %1229 = vmatpush1.bf16.msra.mxu0 0
  %1230 = vmatprep.subr.bf16.mxu0 0
  %1231 = vmatpush1.bf16.msra.mxu0 0
  %1232 = vmatprep.subr.bf16.mxu0 0
  %1233 = vmatpush1.bf16.msra.mxu0 0
  %1234 = vmatprep.subr.bf16.mxu0 0
  %1235 = vmatpush1.bf16.msra.mxu0 0
  %1236 = vmatprep.subr.bf16.mxu0 0
  %1237 = vmatpush1.bf16.msra.mxu0 0
  %1238 = vmatprep.subr.bf16.mxu0 0
  %1239 = vmatpush1.bf16.msra.mxu0 0
  %1240 = vmatprep.subr.bf16.mxu0 0
  %1241 = vmatpush1.bf16.msra.mxu0 0
  %1242 = vmatprep.subr.bf16.mxu0 0
  %1243 = vmatpush1.bf16.msra.mxu0 0
  %1244 = vmatprep.mubr.bf16.mxu0 0
  %1245 = vmatmul.mubr.bf16.gmra.mrb[0].mxu0 %v1117
  %v1246 = vpop.f32.mrb[0].mxu0
  %v1247 = vadd.f32 %v1089, %v1246
  %v1248 = vpop.f32.mrb[0].mxu0
  %v1249 = vpop.f32.mrb[0].mxu0
  %v1250 = vadd.f32 %v1089, %v1249
  %v1251 = vpop.f32.mrb[0].mxu0
  %1252 = vmatprep.mubr.bf16.mxu0 0
  %1253 = vmatmul.mubr.bf16.gmra.mrb[0].mxu0 %v1120
  %v1254 = vpop.f32.mrb[0].mxu0
  %v1255 = vadd.f32 %v1089, %v1254
  %v1256 = vpop.f32.mrb[0].mxu0
  %v1257 = vpop.f32.mrb[0].mxu0
  %v1258 = vadd.f32 %v1089, %v1257
  %v1259 = vpop.f32.mrb[0].mxu0
  %1260 = vmatprep.mubr.bf16.mxu0 0
  %1261 = vmatmul.mubr.bf16.gmra.mrb[0].mxu0 %v1123
  %v1262 = vpop.f32.mrb[0].mxu0
  %v1263 = vadd.f32 %v1089, %v1262
  %v1264 = vpop.f32.mrb[0].mxu0
  %v1265 = vpop.f32.mrb[0].mxu0
  %v1266 = vadd.f32 %v1089, %v1265
  %v1267 = vpop.f32.mrb[0].mxu0
  %1268 = vmatprep.mubr.bf16.mxu0 0
  %1269 = vmatmul.mubr.bf16.gmra.mrb[0].mxu0 %v1126
  %v1270 = vpop.f32.mrb[0].mxu0
  %v1271 = vadd.f32 %v1089, %v1270
  %v1272 = vpop.f32.mrb[0].mxu0
  %v1273 = vpop.f32.mrb[0].mxu0
  %v1274 = vadd.f32 %v1089, %v1273
  %v1275 = vpop.f32.mrb[0].mxu0
  %1276 = vmatprep.mubr.bf16.mxu0 0
  %1277 = vmatmul.mubr.bf16.gmra.mrb[0].mxu0 %v1129
  %v1278 = vpop.f32.mrb[0].mxu0
  %v1279 = vadd.f32 %v1089, %v1278
  %v1280 = vpop.f32.mrb[0].mxu0
  %v1281 = vpop.f32.mrb[0].mxu0
  %v1282 = vadd.f32 %v1089, %v1281
  %v1283 = vpop.f32.mrb[0].mxu0
  %1284 = vmatprep.mubr.bf16.mxu0 0
  %1285 = vmatmul.mubr.bf16.gmra.mrb[0].mxu0 %v1132
  %v1286 = vpop.f32.mrb[0].mxu0
  %v1287 = vadd.f32 %v1089, %v1286
  %v1288 = vpop.f32.mrb[0].mxu0
  %v1289 = vpop.f32.mrb[0].mxu0
  %v1290 = vadd.f32 %v1089, %v1289
  %v1291 = vpop.f32.mrb[0].mxu0
  %1292 = vmatprep.mubr.bf16.mxu0 0
  %1293 = vmatmul.mubr.bf16.gmra.mrb[0].mxu0 %v1135
  %v1294 = vpop.f32.mrb[0].mxu0
  %v1295 = vadd.f32 %v1089, %v1294
  %v1296 = vpop.f32.mrb[0].mxu0
  %v1297 = vpop.f32.mrb[0].mxu0
  %v1298 = vadd.f32 %v1089, %v1297
  %v1299 = vpop.f32.mrb[0].mxu0
  %1300 = vmatprep.mubr.bf16.mxu0 0
  %1301 = vmatmul.mubr.bf16.gmra.mrb[0].mxu0 %v1138
  %v1302 = vpop.f32.mrb[0].mxu0
  %v1303 = vadd.f32 %v1089, %v1302
  %v1304 = vpop.f32.mrb[0].mxu0
  %v1305 = vpop.f32.mrb[0].mxu0
  %v1306 = vadd.f32 %v1089, %v1305
  %v1307 = vpop.f32.mrb[0].mxu0
  %1308 = vmatprep.mubr.bf16.mxu0 0
  %1309 = vmatmul.mubr.bf16.gmra.mrb[0].mxu0 %v1141
  %v1310 = vpop.f32.mrb[0].mxu0
  %v1311 = vadd.f32 %v1089, %v1310
  %v1312 = vpop.f32.mrb[0].mxu0
  %v1313 = vpop.f32.mrb[0].mxu0
  %v1314 = vadd.f32 %v1089, %v1313
  %v1315 = vpop.f32.mrb[0].mxu0
  %1316 = vmatprep.mubr.bf16.mxu0 0
  %1317 = vmatmul.mubr.bf16.gmra.mrb[0].mxu0 %v1144
  %v1318 = vpop.f32.mrb[0].mxu0
  %v1319 = vadd.f32 %v1089, %v1318
  %v1320 = vpop.f32.mrb[0].mxu0
  %v1321 = vpop.f32.mrb[0].mxu0
  %v1322 = vadd.f32 %v1089, %v1321
  %v1323 = vpop.f32.mrb[0].mxu0
  %1324 = vmatprep.mubr.bf16.mxu0 0
  %1325 = vmatmul.mubr.bf16.gmra.mrb[0].mxu0 %v1147
  %v1326 = vpop.f32.mrb[0].mxu0
  %v1327 = vadd.f32 %v1089, %v1326
  %v1328 = vpop.f32.mrb[0].mxu0
  %v1329 = vpop.f32.mrb[0].mxu0
  %v1330 = vadd.f32 %v1089, %v1329
  %v1331 = vpop.f32.mrb[0].mxu0
  %1332 = vmatprep.mubr.bf16.mxu0 0
  %1333 = vmatmul.mubr.bf16.gmra.mrb[0].mxu0 %v1150
  %v1334 = vpop.f32.mrb[0].mxu0
  %v1335 = vadd.f32 %v1089, %v1334
  %v1336 = vpop.f32.mrb[0].mxu0
  %v1337 = vpop.f32.mrb[0].mxu0
  %v1338 = vadd.f32 %v1089, %v1337
  %v1339 = vpop.f32.mrb[0].mxu0
  %1340 = vmatprep.mubr.bf16.mxu0 0
  %1341 = vmatmul.mubr.bf16.gmra.mrb[0].mxu0 %v1153
  %v1342 = vpop.f32.mrb[0].mxu0
  %v1343 = vadd.f32 %v1089, %v1342
  %v1344 = vpop.f32.mrb[0].mxu0
  %v1345 = vpop.f32.mrb[0].mxu0
  %v1346 = vadd.f32 %v1089, %v1345
  %v1347 = vpop.f32.mrb[0].mxu0
  %1348 = vmatprep.mubr.bf16.mxu0 0
  %1349 = vmatmul.mubr.bf16.gmra.mrb[0].mxu0 %v1156
  %v1350 = vpop.f32.mrb[0].mxu0
  %v1351 = vadd.f32 %v1089, %v1350
  %v1352 = vpop.f32.mrb[0].mxu0
  %v1353 = vpop.f32.mrb[0].mxu0
  %v1354 = vadd.f32 %v1089, %v1353
  %v1355 = vpop.f32.mrb[0].mxu0
  %1356 = vmatprep.mubr.bf16.mxu0 0
  %1357 = vmatmul.mubr.bf16.gmra.mrb[0].mxu0 %v1159
  %v1358 = vpop.f32.mrb[0].mxu0
  %v1359 = vadd.f32 %v1089, %v1358
  %v1360 = vpop.f32.mrb[0].mxu0
  %v1361 = vpop.f32.mrb[0].mxu0
  %v1362 = vadd.f32 %v1089, %v1361
  %v1363 = vpop.f32.mrb[0].mxu0
  %1364 = vmatprep.mubr.bf16.mxu0 0
  %1365 = vmatmul.mubr.bf16.gmra.mrb[0].mxu0 %v1162
  %v1366 = vpop.f32.mrb[0].mxu0
  %v1367 = vadd.f32 %v1089, %v1366
  %v1368 = vpop.f32.mrb[0].mxu0
  %v1369 = vpop.f32.mrb[0].mxu0
  %v1370 = vadd.f32 %v1089, %v1369
  %v1371 = vpop.f32.mrb[0].mxu0
  %1372 = vmatprep.mubr.bf16.mxu0 0
  %1373 = vmatmul.mubr.bf16.gmra.mrb[0].mxu0 %v1165
  %v1374 = vpop.f32.mrb[0].mxu0
  %v1375 = vadd.f32 %v1089, %v1374
  %v1376 = vpop.f32.mrb[0].mxu0
  %v1377 = vpop.f32.mrb[0].mxu0
  %v1378 = vadd.f32 %v1089, %v1377
  %v1379 = vpop.f32.mrb[0].mxu0
  %1380 = vmatprep.mubr.bf16.mxu0 0
  %1381 = vmatmul.mubr.bf16.gmra.mrb[0].mxu0 %v1168
  %v1382 = vpop.f32.mrb[0].mxu0
  %v1383 = vadd.f32 %v1089, %v1382
  %v1384 = vpop.f32.mrb[0].mxu0
  %v1385 = vpop.f32.mrb[0].mxu0
  %v1386 = vadd.f32 %v1089, %v1385
  %v1387 = vpop.f32.mrb[0].mxu0
  %1388 = vmatprep.mubr.bf16.mxu0 0
  %1389 = vmatmul.mubr.bf16.gmra.mrb[0].mxu0 %v1171
  %v1390 = vpop.f32.mrb[0].mxu0
  %v1391 = vadd.f32 %v1089, %v1390
  %v1392 = vpop.f32.mrb[0].mxu0
  %v1393 = vpop.f32.mrb[0].mxu0
  %v1394 = vadd.f32 %v1089, %v1393
  %v1395 = vpop.f32.mrb[0].mxu0
  %1396 = vmatprep.mubr.bf16.mxu0 0
  %1397 = vmatmul.mubr.bf16.gmra.mrb[0].mxu0 %v1174
  %v1398 = vpop.f32.mrb[0].mxu0
  %v1399 = vadd.f32 %v1089, %v1398
  %v1400 = vpop.f32.mrb[0].mxu0
  %v1401 = vpop.f32.mrb[0].mxu0
  %v1402 = vadd.f32 %v1089, %v1401
  %v1403 = vpop.f32.mrb[0].mxu0
  %1404 = vmatprep.mubr.bf16.mxu0 0
  %1405 = vmatmul.mubr.bf16.gmra.mrb[0].mxu0 %v1177
  %v1406 = vpop.f32.mrb[0].mxu0
  %v1407 = vadd.f32 %v1089, %v1406
  %v1408 = vpop.f32.mrb[0].mxu0
  %v1409 = vpop.f32.mrb[0].mxu0
  %v1410 = vadd.f32 %v1089, %v1409
  %v1411 = vpop.f32.mrb[0].mxu0
  %1412 = vmatprep.mubr.bf16.mxu0 0
  %1413 = vmatmul.mubr.bf16.gmra.mrb[0].mxu0 %v1180
  %v1414 = vpop.f32.mrb[0].mxu0
  %v1415 = vadd.f32 %v1089, %v1414
  %v1416 = vpop.f32.mrb[0].mxu0
  %v1417 = vpop.f32.mrb[0].mxu0
  %v1418 = vadd.f32 %v1089, %v1417
  %v1419 = vpop.f32.mrb[0].mxu0
  %1420 = vmatprep.mubr.bf16.mxu0 0
  %1421 = vmatmul.mubr.bf16.gmra.mrb[0].mxu0 %v1183
  %v1422 = vpop.f32.mrb[0].mxu0
  %v1423 = vadd.f32 %v1089, %v1422
  %v1424 = vpop.f32.mrb[0].mxu0
  %v1425 = vpop.f32.mrb[0].mxu0
  %v1426 = vadd.f32 %v1089, %v1425
  %v1427 = vpop.f32.mrb[0].mxu0
  %1428 = vmatprep.mubr.bf16.mxu0 0
  %1429 = vmatmul.mubr.bf16.gmra.mrb[0].mxu0 %v1186
  %v1430 = vpop.f32.mrb[0].mxu0
  %v1431 = vadd.f32 %v1089, %v1430
  %v1432 = vpop.f32.mrb[0].mxu0
  %v1433 = vpop.f32.mrb[0].mxu0
  %v1434 = vadd.f32 %v1089, %v1433
  %v1435 = vpop.f32.mrb[0].mxu0
  %1436 = vmatprep.mubr.bf16.mxu0 0
  %1437 = vmatmul.mubr.bf16.gmra.mrb[0].mxu0 %v1189
  %v1438 = vpop.f32.mrb[0].mxu0
  %v1439 = vadd.f32 %v1089, %v1438
  %v1440 = vpop.f32.mrb[0].mxu0
  %v1441 = vpop.f32.mrb[0].mxu0
  %v1442 = vadd.f32 %v1089, %v1441
  %v1443 = vpop.f32.mrb[0].mxu0
  %1444 = vmatprep.mubr.bf16.mxu0 0
  %1445 = vmatmul.mubr.bf16.gmra.mrb[0].mxu0 %v1192
  %v1446 = vpop.f32.mrb[0].mxu0
  %v1447 = vadd.f32 %v1089, %v1446
  %v1448 = vpop.f32.mrb[0].mxu0
  %v1449 = vpop.f32.mrb[0].mxu0
  %v1450 = vadd.f32 %v1089, %v1449
  %v1451 = vpop.f32.mrb[0].mxu0
  %1452 = vmatprep.mubr.bf16.mxu0 0
  %1453 = vmatmul.mubr.bf16.gmra.mrb[0].mxu0 %v1195
  %v1454 = vpop.f32.mrb[0].mxu0
  %v1455 = vadd.f32 %v1089, %v1454
  %v1456 = vpop.f32.mrb[0].mxu0
  %v1457 = vpop.f32.mrb[0].mxu0
  %v1458 = vadd.f32 %v1089, %v1457
  %v1459 = vpop.f32.mrb[0].mxu0
  %1460 = vmatprep.mubr.bf16.mxu0 0
  %1461 = vmatmul.mubr.bf16.gmra.mrb[0].mxu0 %v1198
  %v1462 = vpop.f32.mrb[0].mxu0
  %v1463 = vadd.f32 %v1089, %v1462
  %v1464 = vpop.f32.mrb[0].mxu0
  %v1465 = vpop.f32.mrb[0].mxu0
  %v1466 = vadd.f32 %v1089, %v1465
  %v1467 = vpop.f32.mrb[0].mxu0
  %1468 = vmatprep.mubr.bf16.mxu0 0
  %1469 = vmatmul.mubr.bf16.gmra.mrb[0].mxu0 %v1201
  %v1470 = vpop.f32.mrb[0].mxu0
  %v1471 = vadd.f32 %v1089, %v1470
  %v1472 = vpop.f32.mrb[0].mxu0
  %v1473 = vpop.f32.mrb[0].mxu0
  %v1474 = vadd.f32 %v1089, %v1473
  %v1475 = vpop.f32.mrb[0].mxu0
  %1476 = vmatprep.mubr.bf16.mxu0 0
  %1477 = vmatmul.mubr.bf16.gmra.mrb[0].mxu0 %v1204
  %v1478 = vpop.f32.mrb[0].mxu0
  %v1479 = vadd.f32 %v1089, %v1478
  %v1480 = vpop.f32.mrb[0].mxu0
  %v1481 = vpop.f32.mrb[0].mxu0
  %v1482 = vadd.f32 %v1089, %v1481
  %v1483 = vpop.f32.mrb[0].mxu0
  %1484 = vmatprep.mubr.bf16.mxu0 0
  %1485 = vmatmul.mubr.bf16.gmra.mrb[0].mxu0 %v1207
  %v1486 = vpop.f32.mrb[0].mxu0
  %v1487 = vadd.f32 %v1089, %v1486
  %v1488 = vpop.f32.mrb[0].mxu0
  %v1489 = vpop.f32.mrb[0].mxu0
  %v1490 = vadd.f32 %v1089, %v1489
  %v1491 = vpop.f32.mrb[0].mxu0
  %1492 = vmatprep.mubr.bf16.mxu0 0
  %1493 = vmatmul.mubr.bf16.gmra.mrb[0].mxu0 %v1210
  %v1494 = vpop.f32.mrb[0].mxu0
  %v1495 = vadd.f32 %v1089, %v1494
  %v1496 = vpop.f32.mrb[0].mxu0
  %v1497 = vpop.f32.mrb[0].mxu0
  %v1498 = vadd.f32 %v1089, %v1497
  %v1499 = vpop.f32.mrb[0].mxu0
  %1500 = vdwg.mxu0
  %vm1501 = vcmask 31744
  %1502 = vst.msk [vmem:[%s7] sm:$0xff] %vm1501, %v1247
  %1503 = vst.msk [vmem:[%s7 + $0x8] sm:$0xff] %vm1501, %v1250
  %1504 = vst.msk [vmem:[%s7 + $0x10] sm:$0xff] %vm1501, %v1255
  %1505 = vst.msk [vmem:[%s7 + $0x18] sm:$0xff] %vm1501, %v1258
  %1506 = vst.msk [vmem:[%s7 + $0x20] sm:$0xff] %vm1501, %v1263
  %1507 = vst.msk [vmem:[%s7 + $0x28] sm:$0xff] %vm1501, %v1266
  %1508 = vst.msk [vmem:[%s7 + $0x30] sm:$0xff] %vm1501, %v1271
  %1509 = vst.msk [vmem:[%s7 + $0x38] sm:$0xff] %vm1501, %v1274
  %1510 = vst.msk [vmem:[%s7 + $0x40] sm:$0xff] %vm1501, %v1279
  %1511 = vst.msk [vmem:[%s7 + $0x48] sm:$0xff] %vm1501, %v1282
  %1512 = vst.msk [vmem:[%s7 + $0x50] sm:$0xff] %vm1501, %v1287
  %1513 = vst.msk [vmem:[%s7 + $0x58] sm:$0xff] %vm1501, %v1290
  %1514 = vst.msk [vmem:[%s7 + $0x60] sm:$0xff] %vm1501, %v1295
  %1515 = vst.msk [vmem:[%s7 + $0x68] sm:$0xff] %vm1501, %v1298
  %1516 = vst.msk [vmem:[%s7 + $0x70] sm:$0xff] %vm1501, %v1303
  %1517 = vst.msk [vmem:[%s7 + $0x78] sm:$0xff] %vm1501, %v1306
  %1518 = vst.msk [vmem:[%s7 + $0x80] sm:$0xff] %vm1501, %v1311
  %1519 = vst.msk [vmem:[%s7 + $0x88] sm:$0xff] %vm1501, %v1314
  %1520 = vst.msk [vmem:[%s7 + $0x90] sm:$0xff] %vm1501, %v1319
  %1521 = vst.msk [vmem:[%s7 + $0x98] sm:$0xff] %vm1501, %v1322
  %1522 = vst.msk [vmem:[%s7 + $0xa0] sm:$0xff] %vm1501, %v1327
  %1523 = vst.msk [vmem:[%s7 + $0xa8] sm:$0xff] %vm1501, %v1330
  %1524 = vst.msk [vmem:[%s7 + $0xb0] sm:$0xff] %vm1501, %v1335
  %1525 = vst.msk [vmem:[%s7 + $0xb8] sm:$0xff] %vm1501, %v1338
  %1526 = vst.msk [vmem:[%s7 + $0xc0] sm:$0xff] %vm1501, %v1343
  %1527 = vst.msk [vmem:[%s7 + $0xc8] sm:$0xff] %vm1501, %v1346
  %1528 = vst.msk [vmem:[%s7 + $0xd0] sm:$0xff] %vm1501, %v1351
  %1529 = vst.msk [vmem:[%s7 + $0xd8] sm:$0xff] %vm1501, %v1354
  %1530 = vst.msk [vmem:[%s7 + $0xe0] sm:$0xff] %vm1501, %v1359
  %1531 = vst.msk [vmem:[%s7 + $0xe8] sm:$0xff] %vm1501, %v1362
  %1532 = vst.msk [vmem:[%s7 + $0xf0] sm:$0xff] %vm1501, %v1367
  %1533 = vst.msk [vmem:[%s7 + $0xf8] sm:$0xff] %vm1501, %v1370
  %1534 = vst.msk [vmem:[%s7 + $0x100] sm:$0xff] %vm1501, %v1375
  %1535 = vst.msk [vmem:[%s7 + $0x108] sm:$0xff] %vm1501, %v1378
  %1536 = vst.msk [vmem:[%s7 + $0x110] sm:$0xff] %vm1501, %v1383
  %1537 = vst.msk [vmem:[%s7 + $0x118] sm:$0xff] %vm1501, %v1386
  %1538 = vst.msk [vmem:[%s7 + $0x120] sm:$0xff] %vm1501, %v1391
  %1539 = vst.msk [vmem:[%s7 + $0x128] sm:$0xff] %vm1501, %v1394
  %1540 = vst.msk [vmem:[%s7 + $0x130] sm:$0xff] %vm1501, %v1399
  %1541 = vst.msk [vmem:[%s7 + $0x138] sm:$0xff] %vm1501, %v1402
  %1542 = vst.msk [vmem:[%s7 + $0x140] sm:$0xff] %vm1501, %v1407
  %1543 = vst.msk [vmem:[%s7 + $0x148] sm:$0xff] %vm1501, %v1410
  %1544 = vst.msk [vmem:[%s7 + $0x150] sm:$0xff] %vm1501, %v1415
  %1545 = vst.msk [vmem:[%s7 + $0x158] sm:$0xff] %vm1501, %v1418
  %1546 = vst.msk [vmem:[%s7 + $0x160] sm:$0xff] %vm1501, %v1423
  %1547 = vst.msk [vmem:[%s7 + $0x168] sm:$0xff] %vm1501, %v1426
  %1548 = vst.msk [vmem:[%s7 + $0x170] sm:$0xff] %vm1501, %v1431
  %1549 = vst.msk [vmem:[%s7 + $0x178] sm:$0xff] %vm1501, %v1434
  %1550 = vst.msk [vmem:[%s7 + $0x180] sm:$0xff] %vm1501, %v1439
  %1551 = vst.msk [vmem:[%s7 + $0x188] sm:$0xff] %vm1501, %v1442
  %1552 = vst.msk [vmem:[%s7 + $0x190] sm:$0xff] %vm1501, %v1447
  %1553 = vst.msk [vmem:[%s7 + $0x198] sm:$0xff] %vm1501, %v1450
  %1554 = vst.msk [vmem:[%s7 + $0x1a0] sm:$0xff] %vm1501, %v1455
  %1555 = vst.msk [vmem:[%s7 + $0x1a8] sm:$0xff] %vm1501, %v1458
  %1556 = vst.msk [vmem:[%s7 + $0x1b0] sm:$0xff] %vm1501, %v1463
  %1557 = vst.msk [vmem:[%s7 + $0x1b8] sm:$0xff] %vm1501, %v1466
  %1558 = vst.msk [vmem:[%s7 + $0x1c0] sm:$0xff] %vm1501, %v1471
  %1559 = vst.msk [vmem:[%s7 + $0x1c8] sm:$0xff] %vm1501, %v1474
  %1560 = vst.msk [vmem:[%s7 + $0x1d0] sm:$0xff] %vm1501, %v1479
  %1561 = vst.msk [vmem:[%s7 + $0x1d8] sm:$0xff] %vm1501, %v1482
  %1562 = vst.msk [vmem:[%s7 + $0x1e0] sm:$0xff] %vm1501, %v1487
  %1563 = vst.msk [vmem:[%s7 + $0x1e8] sm:$0xff] %vm1501, %v1490
  %1564 = vst.msk [vmem:[%s7 + $0x1f0] sm:$0xff] %vm1501, %v1495
  %1565 = vst.msk [vmem:[%s7 + $0x1f8] sm:$0xff] %vm1501, %v1498
  // Predicated region
  $region30: #{dqn_forward.1} parent=0 // pred_check
    _
  $region31: #{dqn_forward.1} parent=0 // pred_check_branch
    %1567 = sbr.rel (0) target = $region33
  $region32: #{dqn_forward.1} parent=0 // pred_region
    _
  $region33: #{dqn_forward.1} parent=0 // pred_fallthru
    _
  // Predicated region
  $region34: #{dqn_forward.1} parent=0 // pred_check
    _
  $region35: #{dqn_forward.1} parent=0 // pred_check_branch
    %1569 = sbr.rel (0) target = $region37
  $region36: #{dqn_forward.1} parent=0 // pred_region
    _
  $region37: #{dqn_forward.1} parent=0 // pred_fallthru
    _

</llo_original>
